<compile_context>
chip_gen: v6e
topology: v6e:2x2x1
jax: 0.10.0
libtpu: 0.0.40
codegen_flags: <defaults>
</compile_context>

<pallas_src>
import numpy as np
import jax
import jax.numpy as jnp
from jax.experimental import pallas as pl
from jax.experimental.pallas import tpu as pltpu

EXPANSION = 4
_EPS = 1e-5
_LANE = 128
_F32 = jnp.float32
_BF16 = jnp.bfloat16


# ---------------------------------------------------------------------------
# host-side helpers
# ---------------------------------------------------------------------------
def _rup(v, m):
    return ((v + m - 1) // m) * m


def _pad_last(a, target):
    a = a.astype(_F32)
    pad = target - a.shape[-1]
    if pad == 0:
        return a
    return jnp.pad(a, [(0, 0)] * (a.ndim - 1) + [(0, pad)])


def _pad2(w, rows, cols):
    w = w.astype(_F32)
    return jnp.pad(w, ((0, rows - w.shape[0]), (0, cols - w.shape[1])))


def _bn_affine(stats, count, gamma, beta):
    """Fold train-mode BatchNorm (batch mean, biased variance) into scale/shift."""
    mean = stats[0] / count
    var = jnp.maximum(stats[1] / count - mean * mean, 0.0)
    a = gamma.reshape(-1) * jax.lax.rsqrt(var + _EPS)
    c = beta.reshape(-1) - mean * a
    return a.reshape(1, -1), c.reshape(1, -1)


def _vmem_limit_bytes():
    """~3/4 of physical VMEM, capped: ~96 MiB on v5e/v6e, ~48 MiB on v7x."""
    cap = 128 * 1024 * 1024
    try:
        info = pltpu.get_tpu_info()
        cap = int(getattr(info, "vmem_capacity_bytes", cap))
    except Exception:
        pass
    return int(min(100 * 1024 * 1024, max(32 * 1024 * 1024, (cap * 3) // 4)))


# ---------------------------------------------------------------------------
# in-kernel helpers
# ---------------------------------------------------------------------------
def _write_stats(stat_ref, y):
    """Write per-image per-channel [sum; sum_sq] (f32) to a (2, C) block."""
    stat_ref[...] = jnp.concatenate(
        [jnp.sum(y, axis=0, keepdims=True),
         jnp.sum(y * y, axis=0, keepdims=True)], axis=0)


def _pool_rows(src_ref, pb_ref, H, W, s):
    """AvgPool2d(s) on a pixel-major (H*W, C) f32 VMEM ref.

    Width step: strided-row reads directly from src_ref.
    Height step: static indexing of a (Ho, s, Wo, C) scratch view.
    """
    Ho, Wo = H // s, W // s
    C = src_ref.shape[-1]
    tmp = src_ref[pl.ds(0, H * Wo, stride=s), :]
    for dx in range(1, s):
        tmp = tmp + src_ref[pl.ds(dx, H * Wo, stride=s), :]
    pb_ref[...] = tmp.reshape(Ho, s, Wo, C)
    out = pb_ref[:, 0, :, :]
    for dy in range(1, s):
        out = out + pb_ref[:, dy, :, :]
    return out.reshape(Ho * Wo, C) * (1.0 / (s * s))


# ---------------------------------------------------------------------------
# pass 1: conv1 (1x1) [+ downsample avgpool + 1x1 conv], pre-BN stats
# ---------------------------------------------------------------------------
def _make_pass1_kernel(H, W, stride, has_ds):
    s = stride

    def kernel(*refs):
        it = iter(refs)
        x_ref = next(it)
        w1_ref = next(it)
        wd_ref = next(it) if has_ds else None
        y1_ref = next(it)
        st1_ref = next(it)
        yd_ref = std_ref = None
        if has_ds:
            yd_ref = next(it)
            std_ref = next(it)
        pb_ref = next(it) if (has_ds and s > 1) else None

        x = x_ref[...]                                          # (HW, Cin_p) f32
        y1 = jnp.dot(x.astype(_BF16), w1_ref[...],
                     preferred_element_type=_F32)
        _write_stats(st1_ref, y1)
        y1_ref[...] = y1.astype(_BF16)

        if has_ds:
            xp = _pool_rows(x_ref, pb_ref, H, W, s) if s > 1 else x
            yd = jnp.dot(xp.astype(_BF16), wd_ref[...],
                         preferred_element_type=_F32)
            _write_stats(std_ref, yd)
            yd_ref[...] = yd.astype(_BF16)

    return kernel


# ---------------------------------------------------------------------------
# pass 2: bn1+relu, 3x3 conv as 3 dy-grouped K=3*P matmuls, pre-BN2 stats
# ---------------------------------------------------------------------------
def _make_pass2_kernel(H, W, P_p):
    HW = H * W

    def kernel(y1_ref, a1_ref, c1_ref, w2g_ref, hh_ref, ww_ref, y2_ref, st2_ref):
        h1 = jnp.maximum(y1_ref[...].astype(_F32) * a1_ref[...] + c1_ref[...], 0.0)

        hh = hh_ref[...]                                        # (HW, 1) f32
        ww = ww_ref[...]                                        # (HW, 1) f32
        row_ok = (hh >= 1.0, None, hh <= float(H - 2))
        col_ok = (ww >= 1.0, None, ww <= float(W - 2))

        def combine(a, b):
            if a is None:
                return b
            if b is None:
                return a
            return jnp.logical_and(a, b)

        y2 = jnp.zeros((HW, P_p), _F32)
        for dy in range(3):
            cols = []
            for dx in range(3):
                delta = (dy - 1) * W + (dx - 1)
                src = h1 if delta == 0 else pltpu.roll(
                    h1, shift=(-delta) % HW, axis=0)
                m = combine(row_ok[dy], col_ok[dx])
                if m is not None:
                    src = jnp.where(m, src, 0.0)
                cols.append(src.astype(_BF16))
            z = jnp.concatenate(cols, axis=1)                   # (HW, 3*P_p) bf16
            y2 = y2 + jnp.dot(z, w2g_ref[dy], preferred_element_type=_F32)

        _write_stats(st2_ref, y2)
        y2_ref[...] = y2.astype(_BF16)

    return kernel


# ---------------------------------------------------------------------------
# pass 3: bn2+relu, avgpool(stride), conv3 (1x1), pre-BN3 stats
# ---------------------------------------------------------------------------
def _make_pass3_kernel(H, W, stride):
    s = stride

    def kernel(*refs):
        it = iter(refs)
        y2_ref = next(it)
        a2_ref = next(it)
        c2_ref = next(it)
        w3_ref = next(it)
        y3_ref = next(it)
        st3_ref = next(it)
        pa_ref = pb_ref = None
        if s > 1:
            pa_ref = next(it)
            pb_ref = next(it)

        h2 = jnp.maximum(y2_ref[...].astype(_F32) * a2_ref[...] + c2_ref[...], 0.0)
        if s > 1:
            pa_ref[...] = h2
            p2 = _pool_rows(pa_ref, pb_ref, H, W, s)
        else:
            p2 = h2
        y3 = jnp.dot(p2.astype(_BF16), w3_ref[...], preferred_element_type=_F32)
        _write_stats(st3_ref, y3)
        y3_ref[...] = y3.astype(_BF16)

    return kernel


# ---------------------------------------------------------------------------
# pass 4: bn3 + identity / bn_downsample + add + relu
# ---------------------------------------------------------------------------
def _make_pass4_kernel(has_ds):
    def kernel(*refs):
        if has_ds:
            y3_ref, a3_ref, c3_ref, yd_ref, ad_ref, cd_ref, out_ref = refs
            idn = yd_ref[...].astype(_F32) * ad_ref[...] + cd_ref[...]
        else:
            y3_ref, a3_ref, c3_ref, x_ref, out_ref = refs
            idn = x_ref[...]
        main = y3_ref[...].astype(_F32) * a3_ref[...] + c3_ref[...]
        out_ref[...] = jnp.maximum(main + idn, 0.0)

    return kernel


# ---------------------------------------------------------------------------
# wrapper
# ---------------------------------------------------------------------------
def bottleneck_forward(x_nchw, params, stride):
    N, Cin, H, W = x_nchw.shape
    planes = params["w1"].shape[1]
    Cout = EXPANSION * planes
    s = int(stride)
    has_ds = (s > 1) or (Cin != Cout)
    if not has_ds:
        assert s == 1 and Cin == Cout, \
            "identity branch requires stride==1 and Cin == 4*planes"
    assert H % s == 0 and W % s == 0
    Ho, Wo = H // s, W // s
    HW, HWo = H * W, Ho * Wo
    assert HW % 8 == 0 and HWo % 8 == 0, "pixels per image must be a multiple of 8"
    if s > 1:
        assert Wo % 8 == 0, "W // stride must be a multiple of 8"

    Cin_p = _rup(Cin, _LANE)
    P_p = _rup(planes, _LANE)
    C4_p = _rup(Cout, _LANE)

    # activations: NCHW -> (N, H*W, C), channel lanes padded to 128.  x stays
    # f32 (it is read with strided sublane loads for the downsample pooling);
    # all intermediates are bf16.
    x3 = _pad_last(jnp.transpose(x_nchw, (0, 2, 3, 1)).reshape(N, HW, Cin), Cin_p)

    # weights: pad then cast to bf16 (MXU operands); BN affines stay f32.
    w1 = _pad2(params["w1"], Cin_p, P_p).astype(_BF16)
    w3 = _pad2(params["w3"], P_p, C4_p).astype(_BF16)
    w2p = jnp.zeros((9, P_p, P_p), _F32).at[:, :planes, :planes].set(
        params["w2"].astype(_F32))
    w2g = w2p.reshape(3, 3 * P_p, P_p).astype(_BF16)       # dy-grouped stacks
    g1, b1 = _pad_last(params["g1"], P_p), _pad_last(params["b1"], P_p)
    g2, b2 = _pad_last(params["g2"], P_p), _pad_last(params["b2"], P_p)
    g3, b3 = _pad_last(params["g3"], C4_p), _pad_last(params["b3"], C4_p)
    if has_ds:
        wd = _pad2(params["wd"], Cin_p, C4_p).astype(_BF16)
        gd, bd = _pad_last(params["gd"], C4_p), _pad_last(params["bd"], C4_p)

    # tiny per-pixel coordinate vectors for in-kernel 3x3 validity masks
    ii = np.arange(HW)
    hh = jnp.asarray((ii // W).astype(np.float32).reshape(HW, 1))
    ww = jnp.asarray((ii % W).astype(np.float32).reshape(HW, 1))

    grid = (N,)
    vmem = _vmem_limit_bytes()
    par = pltpu.CompilerParams(dimension_semantics=("parallel",),
                               vmem_limit_bytes=vmem)

    def tile(rows, cols):          # per-image activation tile (batch dim squeezed)
        return pl.BlockSpec((None, rows, cols), lambda n: (n, 0, 0))

    def bcast(shape):              # whole-array operand, same block every step
        nd = len(shape)
        return pl.BlockSpec(shape, lambda n: (0,) * nd)

    def stat_tile(cols):           # per-image (2, C) stats block
        return pl.BlockSpec((None, 2, cols), lambda n: (n, 0, 0))

    def stat_shape(cols):
        return jax.ShapeDtypeStruct((N, 2, cols), _F32)

    # ------------------------------ pass 1 ---------------------------------
    in_specs1 = [tile(HW, Cin_p), bcast((Cin_p, P_p))]
    args1 = [x3, w1]
    out_shape1 = [jax.ShapeDtypeStruct((N, HW, P_p), _BF16), stat_shape(P_p)]
    out_specs1 = [tile(HW, P_p), stat_tile(P_p)]
    scratch1 = []
    if has_ds:
        in_specs1.append(bcast((Cin_p, C4_p)))
        args1.append(wd)
        out_shape1 += [jax.ShapeDtypeStruct((N, HWo, C4_p), _BF16), stat_shape(C4_p)]
        out_specs1 += [tile(HWo, C4_p), stat_tile(C4_p)]
        if s > 1:
            scratch1 = [pltpu.VMEM((Ho, s, Wo, Cin_p), _F32)]

    flops1 = 2 * N * HW * Cin_p * P_p + (2 * N * HWo * Cin_p * C4_p if has_ds else 0)
    bytes1 = 4 * N * HW * Cin_p + 2 * N * HW * P_p + \
        (2 * N * HWo * C4_p if has_ds else 0)
    res1 = pl.pallas_call(
        _make_pass1_kernel(H, W, s, has_ds),
        out_shape=tuple(out_shape1),
        grid_spec=pltpu.PrefetchScalarGridSpec(
            num_scalar_prefetch=0, grid=grid,
            in_specs=in_specs1, out_specs=tuple(out_specs1),
            scratch_shapes=scratch1),
        compiler_params=par,
        cost_estimate=pl.CostEstimate(flops=flops1, transcendentals=0,
                                      bytes_accessed=bytes1),
    )(*args1)
    if has_ds:
        y1, st1, yd, std = res1
    else:
        y1, st1 = res1
    a1, c1 = _bn_affine(st1.sum(axis=0), N * HW, g1, b1)

    # ------------------------------ pass 2 ---------------------------------
    flops2 = 2 * N * HW * (3 * P_p) * P_p * 3
    bytes2 = 2 * 2 * N * HW * P_p + 2 * 9 * P_p * P_p + 8 * HW
    y2, st2 = pl.pallas_call(
        _make_pass2_kernel(H, W, P_p),
        out_shape=(jax.ShapeDtypeStruct((N, HW, P_p), _BF16), stat_shape(P_p)),
        grid_spec=pltpu.PrefetchScalarGridSpec(
            num_scalar_prefetch=0, grid=grid,
            in_specs=[tile(HW, P_p), bcast((1, P_p)), bcast((1, P_p)),
                      bcast((3, 3 * P_p, P_p)), bcast((HW, 1)), bcast((HW, 1))],
            out_specs=(tile(HW, P_p), stat_tile(P_p)),
            scratch_shapes=[]),
        compiler_params=par,
        cost_estimate=pl.CostEstimate(flops=flops2, transcendentals=0,
                                      bytes_accessed=bytes2),
    )(y1, a1, c1, w2g, hh, ww)
    a2, c2 = _bn_affine(st2.sum(axis=0), N * HW, g2, b2)

    # ------------------------------ pass 3 ---------------------------------
    scratch3 = ([pltpu.VMEM((HW, P_p), _F32),
                 pltpu.VMEM((Ho, s, Wo, P_p), _F32)] if s > 1 else [])
    flops3 = 2 * N * HWo * P_p * C4_p
    bytes3 = 2 * N * HW * P_p + 2 * N * HWo * C4_p + 2 * P_p * C4_p
    y3, st3 = pl.pallas_call(
        _make_pass3_kernel(H, W, s),
        out_shape=(jax.ShapeDtypeStruct((N, HWo, C4_p), _BF16), stat_shape(C4_p)),
        grid_spec=pltpu.PrefetchScalarGridSpec(
            num_scalar_prefetch=0, grid=grid,
            in_specs=[tile(HW, P_p), bcast((1, P_p)), bcast((1, P_p)),
                      bcast((P_p, C4_p))],
            out_specs=(tile(HWo, C4_p), stat_tile(C4_p)),
            scratch_shapes=scratch3),
        compiler_params=par,
        cost_estimate=pl.CostEstimate(flops=flops3, transcendentals=0,
                                      bytes_accessed=bytes3),
    )(y2, a2, c2, w3)
    a3, c3 = _bn_affine(st3.sum(axis=0), N * HWo, g3, b3)

    # ------------------------------ pass 4 ---------------------------------
    in_specs4 = [tile(HWo, C4_p), bcast((1, C4_p)), bcast((1, C4_p))]
    args4 = [y3, a3, c3]
    if has_ds:
        ad, cd = _bn_affine(std.sum(axis=0), N * HWo, gd, bd)
        in_specs4 += [tile(HWo, C4_p), bcast((1, C4_p)), bcast((1, C4_p))]
        args4 += [yd, ad, cd]
    else:
        in_specs4.append(tile(HW, Cin_p))     # HW == HWo, Cin_p == C4_p here
        args4.append(x3)
    out4 = pl.pallas_call(
        _make_pass4_kernel(has_ds),
        out_shape=jax.ShapeDtypeStruct((N, HWo, C4_p), _F32),
        grid_spec=pltpu.PrefetchScalarGridSpec(
            num_scalar_prefetch=0, grid=grid,
            in_specs=in_specs4,
            out_specs=tile(HWo, C4_p),
            scratch_shapes=[]),
        compiler_params=par,
        cost_estimate=pl.CostEstimate(flops=4 * N * HWo * C4_p, transcendentals=0,
                                      bytes_accessed=8 * N * HWo * C4_p),
    )(*args4)

    out = out4[:, :, :Cout].reshape(N, Ho, Wo, Cout)
    return jnp.transpose(out, (0, 3, 1, 2))


# ---------------------------------------------------------------------------
# pure-JAX reference (same semantics as the PyTorch module, train-mode BN)
# ---------------------------------------------------------------------------
def _reference_forward(x_nchw, params, stride):
    x = jnp.transpose(x_nchw, (0, 2, 3, 1)).astype(_F32)
    N, H, W, Cin = x.shape
    planes = params["w1"].shape[1]
    Cout = EXPANSION * planes
    has_ds = (stride > 1) or (Cin != Cout)

    def bn(t, g, b, relu):
        mean = t.mean(axis=(0, 1, 2), keepdims=True)
        var = ((t - mean) ** 2).mean(axis=(0, 1, 2), keepdims=True)
        y = (t - mean) * jax.lax.rsqrt(var + _EPS) * g.reshape(1, 1, 1, -1) \
            + b.reshape(1, 1, 1, -1)
        return jnp.maximum(y, 0.0) if relu else y

    def conv1x1(t, w):
        return jnp.einsum("nhwc,cd->nhwd", t, w)

    def conv3x3(t, w9):
        n, h, w, _ = t.shape
        tp = jnp.pad(t, ((0, 0), (1, 1), (1, 1), (0, 0)))
        out = jnp.zeros((n, h, w, w9.shape[2]), _F32)
        for dy in range(3):
            for dx in range(3):
                out = out + jnp.einsum("nhwc,cd->nhwd",
                                       tp[:, dy:dy + h, dx:dx + w, :],
                                       w9[dy * 3 + dx])
        return out

    def avgpool(t, s):
        if s == 1:
            return t
        n, h, w, c = t.shape
        return t.reshape(n, h // s, s, w // s, s, c).mean(axis=(2, 4))

    h1 = bn(conv1x1(x, params["w1"]), params["g1"], params["b1"], relu=True)
    h2 = bn(conv3x3(h1, params["w2"]), params["g2"], params["b2"], relu=True)
    h2 = avgpool(h2, stride)
    h3 = bn(conv1x1(h2, params["w3"]), params["g3"], params["b3"], relu=False)
    if has_ds:
        idn = bn(conv1x1(avgpool(x, stride), params["wd"]),
                 params["gd"], params["bd"], relu=False)
    else:
        idn = x
    return jnp.transpose(jnp.maximum(h3 + idn, 0.0), (0, 3, 1, 2))


# ---------------------------------------------------------------------------
# self-test
# ---------------------------------------------------------------------------
if __name__ == "__main__":
    def make_params(key, inplanes, planes):
        Cout = EXPANSION * planes
        keys = jax.random.split(key, 12)

        def nrm(k, shape, scale=0.1):
            return scale * jax.random.normal(k, shape, dtype=_F32)

        return {
            "w1": nrm(keys[0], (inplanes, planes)),      # 1x1 conv: (Cin, Cout)
            "g1": 1.0 + nrm(keys[1], (1, planes)),
            "b1": nrm(keys[2], (1, planes)),
            "w2": nrm(keys[3], (9, planes, planes)),     # 3x3 conv: [ky*3+kx, Cin, Cout]
            "g2": 1.0 + nrm(keys[4], (1, planes)),
            "b2": nrm(keys[5], (1, planes)),
            "w3": nrm(keys[6], (planes, Cout)),
            "g3": 1.0 + nrm(keys[7], (1, Cout)),
            "b3": nrm(keys[8], (1, Cout)),
            "wd": nrm(keys[9], (inplanes, Cout)),        # downsample 1x1 conv
            "gd": 1.0 + nrm(keys[10], (1, Cout)),
            "bd": nrm(keys[11], (1, Cout)),
        }

    key = jax.random.PRNGKey(0)
    k1, k2, k3, k4 = jax.random.split(key, 4)

    # tolerance reflects bf16 matmul operands / bf16 intermediates vs f32 ref
    TOL = dict(rtol=5e-2, atol=5e-2)

    # -- config A: stride-2 block with downsample branch (the common CLIP case)
    N, inplanes, H, W, planes, stride = 2, 8, 16, 16, 8, 2
    params_a = make_params(k1, inplanes, planes)
    x_a = jax.random.normal(k2, (N, inplanes, H, W), dtype=_F32)
    out_a = jax.block_until_ready(bottleneck_forward(x_a, params_a, stride))
    ref_a = _reference_forward(x_a, params_a, stride)
    assert out_a.shape == (N, EXPANSION * planes, H // stride, W // stride)
    np.testing.assert_allclose(np.asarray(out_a), np.asarray(ref_a), **TOL)

    # -- config B: stride-1 identity block (no downsample branch)
    inplanes_b = EXPANSION * planes
    params_b = make_params(k3, inplanes_b, planes)
    x_b = jax.random.normal(k4, (N, inplanes_b, H, W), dtype=_F32)
    out_b = jax.block_until_ready(bottleneck_forward(x_b, params_b, 1))
    ref_b = _reference_forward(x_b, params_b, 1)
    assert out_b.shape == (N, EXPANSION * planes, H, W)
    np.testing.assert_allclose(np.asarray(out_b), np.asarray(ref_b), **TOL)

    print("KERNEL_OK")
</pallas_src>

<mosaic_0001>
module attributes {stable_mosaic.version = 11 : i64} {
  func.func @kernel(%arg0: i32, %arg1: memref<1x256x128xf32, #tpu.memory_space<vmem>>, %arg2: memref<128x128xbf16, #tpu.memory_space<vmem>>, %arg3: memref<128x128xbf16, #tpu.memory_space<vmem>>, %arg4: memref<1x256x128xbf16, #tpu.memory_space<vmem>>, %arg5: memref<1x2x128xf32, #tpu.memory_space<vmem>>, %arg6: memref<1x64x128xbf16, #tpu.memory_space<vmem>>, %arg7: memref<1x2x128xf32, #tpu.memory_space<vmem>>, %arg8: memref<8x2x8x128xf32, #tpu.memory_space<vmem>>) attributes {dimension_semantics = [#tpu.dimension_semantics<parallel>], iteration_bounds = array<i64: 2>, scalar_prefetch = 0 : i64, scratch_operands = 1 : i64, tpu.core_type = #tpu.core_type<tc>, window_params = [{transform_indices = @transform_0, window_bounds = array<i64: 1, 256, 128>}, {pipeline_mode = #tpu.pipeline_mode<synchronous>, transform_indices = @transform_1, window_bounds = array<i64: 128, 128>}, {pipeline_mode = #tpu.pipeline_mode<synchronous>, transform_indices = @transform_2, window_bounds = array<i64: 128, 128>}, {transform_indices = @transform_3, window_bounds = array<i64: 1, 256, 128>}, {transform_indices = @transform_4, window_bounds = array<i64: 1, 2, 128>}, {transform_indices = @transform_5, window_bounds = array<i64: 1, 64, 128>}, {transform_indices = @transform_6, window_bounds = array<i64: 1, 2, 128>}]} {
    %c0 = arith.constant 0 : index
    %c0_0 = arith.constant 0 : index
    %c0_1 = arith.constant 0 : index
    %0 = vector.load %arg1[%c0, %c0_0, %c0_1] : memref<1x256x128xf32, #tpu.memory_space<vmem>>, vector<1x256x128xf32>
    %1 = vector.shape_cast %0 : vector<1x256x128xf32> to vector<256x128xf32>
    %2 = arith.truncf %1 : vector<256x128xf32> to vector<256x128xbf16>
    %c0_2 = arith.constant 0 : index
    %c0_3 = arith.constant 0 : index
    %3 = vector.load %arg2[%c0_2, %c0_3] : memref<128x128xbf16, #tpu.memory_space<vmem>>, vector<128x128xbf16>
    %cst = arith.constant dense<0.000000e+00> : vector<256x128xf32>
    %4 = tpu.matmul %2, %3, %cst {dimension_numbers = #tpu.dot_dimension_numbers<[1], [0], [0], [1], [0, 0, 1, 1], [], []>} : vector<256x128xbf16>, vector<128x128xbf16>, vector<256x128xf32> -> vector<256x128xf32>
    %cst_4 = arith.constant dense<0.000000e+00> : vector<128xf32>
    %5 = vector.multi_reduction <add>, %4, %cst_4 [0] : vector<256x128xf32> to vector<128xf32>
    %6 = vector.shape_cast %5 : vector<128xf32> to vector<1x128xf32>
    %7 = arith.mulf %4, %4 : vector<256x128xf32>
    %cst_5 = arith.constant dense<0.000000e+00> : vector<128xf32>
    %8 = vector.multi_reduction <add>, %7, %cst_5 [0] : vector<256x128xf32> to vector<128xf32>
    %9 = vector.shape_cast %8 : vector<128xf32> to vector<1x128xf32>
    %10 = tpu.concatenate %6, %9 in 0 : vector<1x128xf32>, vector<1x128xf32> -> vector<2x128xf32>
    %c0_6 = arith.constant 0 : index
    %c0_7 = arith.constant 0 : index
    %c0_8 = arith.constant 0 : index
    %11 = vector.load %arg5[%c0_6, %c0_7, %c0_8] : memref<1x2x128xf32, #tpu.memory_space<vmem>>, vector<1x2x128xf32>
    %12 = vector.shape_cast %11 : vector<1x2x128xf32> to vector<2x128xf32>
    %13 = vector.shape_cast %10 : vector<2x128xf32> to vector<1x2x128xf32>
    tpu.vector_store %arg5[%c0_6, %c0_7, %c0_8], %13 {strides = array<i32>} : memref<1x2x128xf32, #tpu.memory_space<vmem>>, vector<1x2x128xf32>,
    %14 = arith.truncf %4 : vector<256x128xf32> to vector<256x128xbf16>
    %c0_9 = arith.constant 0 : index
    %c0_10 = arith.constant 0 : index
    %c0_11 = arith.constant 0 : index
    %15 = vector.load %arg4[%c0_9, %c0_10, %c0_11] : memref<1x256x128xbf16, #tpu.memory_space<vmem>>, vector<1x256x128xbf16>
    %16 = vector.shape_cast %15 : vector<1x256x128xbf16> to vector<256x128xbf16>
    %17 = vector.shape_cast %14 : vector<256x128xbf16> to vector<1x256x128xbf16>
    tpu.vector_store %arg4[%c0_9, %c0_10, %c0_11], %17 {strides = array<i32>} : memref<1x256x128xbf16, #tpu.memory_space<vmem>>, vector<1x256x128xbf16>,
    %c0_12 = arith.constant 0 : index
    %c0_13 = arith.constant 0 : index
    %c0_14 = arith.constant 0 : index
    %18 = tpu.strided_load %arg1[%c0_12, %c0_13, %c0_14] {strides = array<i32: 1, 2, 1>} : memref<1x256x128xf32, #tpu.memory_space<vmem>>, vector<1x128x128xf32>
    %19 = vector.shape_cast %18 : vector<1x128x128xf32> to vector<128x128xf32>
    %c0_15 = arith.constant 0 : index
    %c1 = arith.constant 1 : index
    %c0_16 = arith.constant 0 : index
    %20 = tpu.strided_load %arg1[%c0_15, %c1, %c0_16] {strides = array<i32: 1, 2, 1>} : memref<1x256x128xf32, #tpu.memory_space<vmem>>, vector<1x128x128xf32>
    %21 = vector.shape_cast %20 : vector<1x128x128xf32> to vector<128x128xf32>
    %22 = arith.addf %19, %21 : vector<128x128xf32>
    %23 = vector.shape_cast %22 : vector<128x128xf32> to vector<8x2x8x128xf32>
    %c0_17 = arith.constant 0 : index
    %c0_18 = arith.constant 0 : index
    %c0_19 = arith.constant 0 : index
    %c0_20 = arith.constant 0 : index
    %24 = vector.load %arg8[%c0_17, %c0_18, %c0_19, %c0_20] : memref<8x2x8x128xf32, #tpu.memory_space<vmem>>, vector<8x2x8x128xf32>
    tpu.vector_store %arg8[%c0_17, %c0_18, %c0_19, %c0_20], %23 {strides = array<i32>} : memref<8x2x8x128xf32, #tpu.memory_space<vmem>>, vector<8x2x8x128xf32>,
    %c0_21 = arith.constant 0 : index
    %c0_22 = arith.constant 0 : index
    %c0_23 = arith.constant 0 : index
    %c0_24 = arith.constant 0 : index
    %25 = vector.load %arg8[%c0_21, %c0_22, %c0_23, %c0_24] : memref<8x2x8x128xf32, #tpu.memory_space<vmem>>, vector<8x1x8x128xf32>
    %26 = vector.shape_cast %25 : vector<8x1x8x128xf32> to vector<8x8x128xf32>
    %c0_25 = arith.constant 0 : index
    %c1_26 = arith.constant 1 : index
    %c0_27 = arith.constant 0 : index
    %c0_28 = arith.constant 0 : index
    %27 = vector.load %arg8[%c0_25, %c1_26, %c0_27, %c0_28] : memref<8x2x8x128xf32, #tpu.memory_space<vmem>>, vector<8x1x8x128xf32>
    %28 = vector.shape_cast %27 : vector<8x1x8x128xf32> to vector<8x8x128xf32>
    %29 = arith.addf %26, %28 : vector<8x8x128xf32>
    %30 = vector.shape_cast %29 : vector<8x8x128xf32> to vector<64x128xf32>
    %cst_29 = arith.constant 2.500000e-01 : f32
    %31 = vector.broadcast %cst_29 : f32 to vector<64x128xf32>
    %32 = arith.mulf %30, %31 : vector<64x128xf32>
    %33 = arith.truncf %32 : vector<64x128xf32> to vector<64x128xbf16>
    %c0_30 = arith.constant 0 : index
    %c0_31 = arith.constant 0 : index
    %34 = vector.load %arg3[%c0_30, %c0_31] : memref<128x128xbf16, #tpu.memory_space<vmem>>, vector<128x128xbf16>
    %cst_32 = arith.constant dense<0.000000e+00> : vector<64x128xf32>
    %35 = tpu.matmul %33, %34, %cst_32 {dimension_numbers = #tpu.dot_dimension_numbers<[1], [0], [0], [1], [0, 0, 1, 1], [], []>} : vector<64x128xbf16>, vector<128x128xbf16>, vector<64x128xf32> -> vector<64x128xf32>
    %cst_33 = arith.constant dense<0.000000e+00> : vector<128xf32>
    %36 = vector.multi_reduction <add>, %35, %cst_33 [0] : vector<64x128xf32> to vector<128xf32>
    %37 = vector.shape_cast %36 : vector<128xf32> to vector<1x128xf32>
    %38 = arith.mulf %35, %35 : vector<64x128xf32>
    %cst_34 = arith.constant dense<0.000000e+00> : vector<128xf32>
    %39 = vector.multi_reduction <add>, %38, %cst_34 [0] : vector<64x128xf32> to vector<128xf32>
    %40 = vector.shape_cast %39 : vector<128xf32> to vector<1x128xf32>
    %41 = tpu.concatenate %37, %40 in 0 : vector<1x128xf32>, vector<1x128xf32> -> vector<2x128xf32>
    %c0_35 = arith.constant 0 : index
    %c0_36 = arith.constant 0 : index
    %c0_37 = arith.constant 0 : index
    %42 = vector.load %arg7[%c0_35, %c0_36, %c0_37] : memref<1x2x128xf32, #tpu.memory_space<vmem>>, vector<1x2x128xf32>
    %43 = vector.shape_cast %42 : vector<1x2x128xf32> to vector<2x128xf32>
    %44 = vector.shape_cast %41 : vector<2x128xf32> to vector<1x2x128xf32>
    tpu.vector_store %arg7[%c0_35, %c0_36, %c0_37], %44 {strides = array<i32>} : memref<1x2x128xf32, #tpu.memory_space<vmem>>, vector<1x2x128xf32>,
    %45 = arith.truncf %35 : vector<64x128xf32> to vector<64x128xbf16>
    %c0_38 = arith.constant 0 : index
    %c0_39 = arith.constant 0 : index
    %c0_40 = arith.constant 0 : index
    %46 = vector.load %arg6[%c0_38, %c0_39, %c0_40] : memref<1x64x128xbf16, #tpu.memory_space<vmem>>, vector<1x64x128xbf16>
    %47 = vector.shape_cast %46 : vector<1x64x128xbf16> to vector<64x128xbf16>
    %48 = vector.shape_cast %45 : vector<64x128xbf16> to vector<1x64x128xbf16>
    tpu.vector_store %arg6[%c0_38, %c0_39, %c0_40], %48 {strides = array<i32>} : memref<1x64x128xbf16, #tpu.memory_space<vmem>>, vector<1x64x128xbf16>,
    return
  }
  func.func @transform_0(%arg0: i32) -> (i32, i32, i32) {
    %c0_i32 = arith.constant 0 : i32
    %c0_i32_0 = arith.constant 0 : i32
    %c0_i32_1 = arith.constant 0 : i32
    return %arg0, %c0_i32, %c0_i32_0 : i32, i32, i32
  }
  func.func @transform_1(%arg0: i32) -> (i32, i32) {
    %c0_i32 = arith.constant 0 : i32
    %c0_i32_0 = arith.constant 0 : i32
    %c0_i32_1 = arith.constant 0 : i32
    return %c0_i32, %c0_i32_0 : i32, i32
  }
  func.func @transform_2(%arg0: i32) -> (i32, i32) {
    %c0_i32 = arith.constant 0 : i32
    %c0_i32_0 = arith.constant 0 : i32
    %c0_i32_1 = arith.constant 0 : i32
    return %c0_i32, %c0_i32_0 : i32, i32
  }
  func.func @transform_3(%arg0: i32) -> (i32, i32, i32) {
    %c0_i32 = arith.constant 0 : i32
    %c0_i32_0 = arith.constant 0 : i32
    %c0_i32_1 = arith.constant 0 : i32
    return %arg0, %c0_i32, %c0_i32_0 : i32, i32, i32
  }
  func.func @transform_4(%arg0: i32) -> (i32, i32, i32) {
    %c0_i32 = arith.constant 0 : i32
    %c0_i32_0 = arith.constant 0 : i32
    %c0_i32_1 = arith.constant 0 : i32
    return %arg0, %c0_i32, %c0_i32_0 : i32, i32, i32
  }
  func.func @transform_5(%arg0: i32) -> (i32, i32, i32) {
    %c0_i32 = arith.constant 0 : i32
    %c0_i32_0 = arith.constant 0 : i32
    %c0_i32_1 = arith.constant 0 : i32
    return %arg0, %c0_i32, %c0_i32_0 : i32, i32, i32
  }
  func.func @transform_6(%arg0: i32) -> (i32, i32, i32) {
    %c0_i32 = arith.constant 0 : i32
    %c0_i32_0 = arith.constant 0 : i32
    %c0_i32_1 = arith.constant 0 : i32
    return %arg0, %c0_i32, %c0_i32_0 : i32, i32, i32
  }
}

</mosaic_0001>

<llo_original>
// kernel: tpu_custom_call.1
$region0: #{tpu_custom_call.1}
  #allocation0 [shape = 'u32[]', space=smem, size = 0x4, offset = 0x4, fixed_abs, tag = 'smem constant byte address 0x4 - core index']
  #allocation1 [shape = 'u32[144,128]{1,0:T(1,128)}', space=vmem, size = 0x12000, scoped, tag = 'internal scratch']
  #allocation2 [shape = 'f32[8,2,8,128]{3,2,1,0:T(8,128)}', space=vmem, size = 0x10000, scoped, tag = 'scratch operand']
  %s0 = inlined_call_operand.hbm [shape: f32[2,256,128], index: 0, kind: input, shape index: {}]
  %s1 = inlined_call_operand.hbm [shape: bf16[128,128], index: 1, kind: input, shape index: {}]
  %s2 = inlined_call_operand.hbm [shape: bf16[128,128], index: 2, kind: input, shape index: {}]
  %s3 = inlined_call_operand.hbm [shape: bf16[2,256,128], index: 3, kind: output, shape index: {0}]
  %s4 = inlined_call_operand.hbm [shape: f32[2,2,128], index: 4, kind: output, shape index: {1}]
  %s5 = inlined_call_operand.hbm [shape: bf16[2,64,128], index: 5, kind: output, shape index: {2}]
  %s6 = inlined_call_operand.hbm [shape: f32[2,2,128], index: 6, kind: output, shape index: {3}]
  %7 = xla_tuple %s3, %s4, %s5, %s6
  %s8 = sld [smem:[#allocation0]]
  $region81: #{tpu_custom_call.1} parent=0
    _
  %s10 = ssub.s32 1, %s8
  %s11 = scalar_select 0, %s10, %s8
  $region1: #{tpu_custom_call.1} parent=0
    #allocation3 [shape = 'u8[262144]{0}', space=vmem, size = 0x40000, scoped, tag = 'input window, operand 0']
    #allocation4 [shape = 's32[2]{0}', space=sflag, size = 0x8, scoped, tag = 'scoped memory for tpu_custom_call.1']
    #allocation5 [shape = 's32[2]{0}', space=sflag, size = 0x8, scoped, tag = 'scoped memory for tpu_custom_call.1']
    #allocation6 [shape = 'u8[32768]{0}', space=vmem, size = 0x8000, scoped, tag = 'input window, operand 1, single buffered']
    #allocation7 [shape = 's32[1]{0}', space=sflag, size = 0x4, scoped, tag = 'scoped memory for tpu_custom_call.1']
    #allocation8 [shape = 'u8[32768]{0}', space=vmem, size = 0x8000, scoped, tag = 'input window, operand 2, single buffered']
    #allocation9 [shape = 'u8[131072]{0}', space=vmem, size = 0x20000, scoped, tag = 'output window, operand 0']
    #allocation10 [shape = 'u8[2048]{0}', space=vmem, size = 0x800, scoped, tag = 'output window, operand 1']
    #allocation11 [shape = 's32[2]{0}', space=sflag, size = 0x8, scoped, tag = 'scoped memory for tpu_custom_call.1']
    #allocation12 [shape = 'u8[32768]{0}', space=vmem, size = 0x8000, scoped, tag = 'output window, operand 2']
    #allocation13 [shape = 'u8[2048]{0}', space=vmem, size = 0x800, scoped, tag = 'output window, operand 3']
    #allocation14 [shape = 's32[2]{0}', space=sflag, size = 0x8, scoped, tag = 'scoped memory for tpu_custom_call.1']
    %12 = vsyncpa [#allocation4], 0
    %s13 = scalar_lea.sflag [#allocation4], 1
    %14 = vsyncpa %s13, 0
    %15 = vsyncpa [#allocation7], 0
    %16 = vsyncpa [#allocation5], 0
    %s17 = scalar_lea.sflag [#allocation5], 1
    %18 = vsyncpa %s17, 0
    %19 = vsyncpa [#allocation11], 0
    %s20 = scalar_lea.sflag [#allocation11], 1
    %21 = vsyncpa %s20, 0
    %22 = vsyncpa [#allocation14], 0
    %s23 = scalar_lea.sflag [#allocation14], 1
    %24 = vsyncpa %s23, 0
    loop: start=0, step=1, limit=4
    $region2: #{tpu_custom_call.1} parent=1 // loop_pre_header
      _
    $region3: #{tpu_custom_call.1} parent=1 // loop_header
      %s26 = sphi 0, %s30
      %p27 = scmp.ge.s32.totalorder %s26, 4
      %s36 = sphi 0, %s38
      %s39 = sphi 0, %s36
      %s40 = sphi 0, %s39
      %s56 = sphi 0, %s40
      %s60 = sphi 0, %s60
      %s62 = sphi 0, %s60
      %s63 = sphi 0, %s62
      %s77 = sphi 0, %s63
      %s81 = sphi 0, %s81
      %s83 = sphi 0, %s81
      %s84 = sphi 0, %s83
      %s98 = sphi 0, %s84
      %s104 = sphi 0, %s106
      %s107 = sphi 0, %s104
      %s108 = sphi 0, %s107
      %s124 = sphi 0, %s108
      %s130 = sphi 0, %s132
      %s133 = sphi 0, %s130
      %s134 = sphi 0, %s133
      %s150 = sphi 0, %s134
      %s156 = sphi 0, %s158
      %s159 = sphi 0, %s156
      %s160 = sphi 0, %s159
      %s176 = sphi 0, %s160
      %s182 = sphi 0, %s184
      %s185 = sphi 0, %s182
      %s186 = sphi 0, %s185
      %s202 = sphi 0, %s186
    $region4: #{tpu_custom_call.1} parent=1 // loop_header_branch
      %29 = sbr.rel (%p27) target = $region8
    $region5: #{tpu_custom_call.1} parent=1 // loop_body
      %s31 = ssub.s32 %s26, 1
      %s32 = ssub.s32 %s26, 2
      %s33 = sadd.s32 %s26, 1
      %s34 = ssub.s32 %s26, %s33
      %p35 = scmp.eq.s32.totalorder %s34, 0
      %s37 = sadd.s32 %s36, 1
      %s38 = scalar_select %p35, %s36, %s37
      %p41 = pneg %p35
      %p42 = scmp.eq.s32.totalorder %s26, 1
      %p43 = por %p41, %p42
      %p44 = scmp.ne.s32.totalorder %s36, %s39
      %p45 = scmp.eq.s32.totalorder %s26, 0
      %p46 = por %p44, %p45
      %p47 = scmp.ne.s32.totalorder %s36, %s39
      %p48 = scmp.eq.s32.totalorder %s31, 1
      %p49 = por %p47, %p48
      %p50 = scmp.ne.s32.totalorder %s39, %s40
      %p51 = scmp.eq.s32.totalorder %s31, 0
      %p52 = por %p50, %p51
      %p53 = scmp.ne.s32.totalorder %s39, %s40
      %p54 = scmp.eq.s32.totalorder %s32, 1
      %p55 = por %p53, %p54
      %p57 = scmp.ne.s32.totalorder %s40, %s56
      %p58 = scmp.eq.s32.totalorder %s32, 0
      %p59 = por %p57, %p58
      %s61 = sadd.s32 %s60, 1
      %p64 = scmp.eq.s32.totalorder %s26, 1
      %p65 = scmp.ne.s32.totalorder %s60, %s62
      %p66 = scmp.eq.s32.totalorder %s26, 0
      %p67 = por %p65, %p66
      %p68 = scmp.ne.s32.totalorder %s60, %s62
      %p69 = scmp.eq.s32.totalorder %s31, 1
      %p70 = por %p68, %p69
      %p71 = scmp.ne.s32.totalorder %s62, %s63
      %p72 = scmp.eq.s32.totalorder %s31, 0
      %p73 = por %p71, %p72
      %p74 = scmp.ne.s32.totalorder %s62, %s63
      %p75 = scmp.eq.s32.totalorder %s32, 1
      %p76 = por %p74, %p75
      %p78 = scmp.ne.s32.totalorder %s63, %s77
      %p79 = scmp.eq.s32.totalorder %s32, 0
      %p80 = por %p78, %p79
      %s82 = sadd.s32 %s81, 1
      %p85 = scmp.eq.s32.totalorder %s26, 1
      %p86 = scmp.ne.s32.totalorder %s81, %s83
      %p87 = scmp.eq.s32.totalorder %s26, 0
      %p88 = por %p86, %p87
      %p89 = scmp.ne.s32.totalorder %s81, %s83
      %p90 = scmp.eq.s32.totalorder %s31, 1
      %p91 = por %p89, %p90
      %p92 = scmp.ne.s32.totalorder %s83, %s84
      %p93 = scmp.eq.s32.totalorder %s31, 0
      %p94 = por %p92, %p93
      %p95 = scmp.ne.s32.totalorder %s83, %s84
      %p96 = scmp.eq.s32.totalorder %s32, 1
      %p97 = por %p95, %p96
      %p99 = scmp.ne.s32.totalorder %s84, %s98
      %p100 = scmp.eq.s32.totalorder %s32, 0
      %p101 = por %p99, %p100
      %s102 = ssub.s32 %s26, %s33
      %p103 = scmp.eq.s32.totalorder %s102, 0
      %s105 = sadd.s32 %s104, 1
      %s106 = scalar_select %p103, %s104, %s105
      %p109 = pneg %p103
      %p110 = scmp.eq.s32.totalorder %s26, 1
      %p111 = por %p109, %p110
      %p112 = scmp.ne.s32.totalorder %s104, %s107
      %p113 = scmp.eq.s32.totalorder %s26, 0
      %p114 = por %p112, %p113
      %p115 = scmp.ne.s32.totalorder %s104, %s107
      %p116 = scmp.eq.s32.totalorder %s31, 1
      %p117 = por %p115, %p116
      %p118 = scmp.ne.s32.totalorder %s107, %s108
      %p119 = scmp.eq.s32.totalorder %s31, 0
      %p120 = por %p118, %p119
      %p121 = scmp.ne.s32.totalorder %s107, %s108
      %p122 = scmp.eq.s32.totalorder %s32, 1
      %p123 = por %p121, %p122
      %p125 = scmp.ne.s32.totalorder %s108, %s124
      %p126 = scmp.eq.s32.totalorder %s32, 0
      %p127 = por %p125, %p126
      %s128 = ssub.s32 %s26, %s33
      %p129 = scmp.eq.s32.totalorder %s128, 0
      %s131 = sadd.s32 %s130, 1
      %s132 = scalar_select %p129, %s130, %s131
      %p135 = pneg %p129
      %p136 = scmp.eq.s32.totalorder %s26, 1
      %p137 = por %p135, %p136
      %p138 = scmp.ne.s32.totalorder %s130, %s133
      %p139 = scmp.eq.s32.totalorder %s26, 0
      %p140 = por %p138, %p139
      %p141 = scmp.ne.s32.totalorder %s130, %s133
      %p142 = scmp.eq.s32.totalorder %s31, 1
      %p143 = por %p141, %p142
      %p144 = scmp.ne.s32.totalorder %s133, %s134
      %p145 = scmp.eq.s32.totalorder %s31, 0
      %p146 = por %p144, %p145
      %p147 = scmp.ne.s32.totalorder %s133, %s134
      %p148 = scmp.eq.s32.totalorder %s32, 1
      %p149 = por %p147, %p148
      %p151 = scmp.ne.s32.totalorder %s134, %s150
      %p152 = scmp.eq.s32.totalorder %s32, 0
      %p153 = por %p151, %p152
      %s154 = ssub.s32 %s26, %s33
      %p155 = scmp.eq.s32.totalorder %s154, 0
      %s157 = sadd.s32 %s156, 1
      %s158 = scalar_select %p155, %s156, %s157
      %p161 = pneg %p155
      %p162 = scmp.eq.s32.totalorder %s26, 1
      %p163 = por %p161, %p162
      %p164 = scmp.ne.s32.totalorder %s156, %s159
      %p165 = scmp.eq.s32.totalorder %s26, 0
      %p166 = por %p164, %p165
      %p167 = scmp.ne.s32.totalorder %s156, %s159
      %p168 = scmp.eq.s32.totalorder %s31, 1
      %p169 = por %p167, %p168
      %p170 = scmp.ne.s32.totalorder %s159, %s160
      %p171 = scmp.eq.s32.totalorder %s31, 0
      %p172 = por %p170, %p171
      %p173 = scmp.ne.s32.totalorder %s159, %s160
      %p174 = scmp.eq.s32.totalorder %s32, 1
      %p175 = por %p173, %p174
      %p177 = scmp.ne.s32.totalorder %s160, %s176
      %p178 = scmp.eq.s32.totalorder %s32, 0
      %p179 = por %p177, %p178
      %s180 = ssub.s32 %s26, %s33
      %p181 = scmp.eq.s32.totalorder %s180, 0
      %s183 = sadd.s32 %s182, 1
      %s184 = scalar_select %p181, %s182, %s183
      %p187 = pneg %p181
      %p188 = scmp.eq.s32.totalorder %s26, 1
      %p189 = por %p187, %p188
      %p190 = scmp.ne.s32.totalorder %s182, %s185
      %p191 = scmp.eq.s32.totalorder %s26, 0
      %p192 = por %p190, %p191
      %p193 = scmp.ne.s32.totalorder %s182, %s185
      %p194 = scmp.eq.s32.totalorder %s31, 1
      %p195 = por %p193, %p194
      %p196 = scmp.ne.s32.totalorder %s185, %s186
      %p197 = scmp.eq.s32.totalorder %s31, 0
      %p198 = por %p196, %p197
      %p199 = scmp.ne.s32.totalorder %s185, %s186
      %p200 = scmp.eq.s32.totalorder %s32, 1
      %p201 = por %p199, %p200
      %p203 = scmp.ne.s32.totalorder %s186, %s202
      %p204 = scmp.eq.s32.totalorder %s32, 0
      %p205 = por %p203, %p204
      %p206 = scmp.le.s32.totalorder 1, %s26
      %p207 = scmp.lt.s32.totalorder %s26, 3
      %p208 = pnand %p206, %p207
      %p209 = pneg %p208
      // Predicated region
      $region9: #{tpu_custom_call.1} parent=5 // pred_check
        _
      $region10: #{tpu_custom_call.1} parent=5 // pred_check_branch
        %211 = sbr.rel (%p208) target = $region12
      $region11: #{tpu_custom_call.1} parent=5 // pred_region
        %s212 = ssub.s32 %s26, 1
        // Predicated region
        $region13: #{tpu_custom_call.1} parent=11 // pred_check
          %p213 = pneg %p73
        $region14: #{tpu_custom_call.1} parent=11 // pred_check_branch
          %215 = sbr.rel (%p213) target = $region16
        $region15: #{tpu_custom_call.1} parent=11 // pred_region
          %s217 = ssub.s32 1024, 1024
          %218 = vsyncadd [#allocation7], %s217
          %s219 = sshll.u32 [#allocation6], 4
          %s220 = int_to_ptr.vmem [resolvable:$true] %s219
          %225 = dma.hbm_to_vmem [thread:$0]  %s1, 1024, %s220, [#allocation7], 64, 64, 4
        $region16: #{tpu_custom_call.1} parent=11 // pred_fallthru
          _
        // Predicated region
        $region17: #{tpu_custom_call.1} parent=11 // pred_check
          %p226 = pneg %p94
        $region18: #{tpu_custom_call.1} parent=11 // pred_check_branch
          %228 = sbr.rel (%p226) target = $region20
        $region19: #{tpu_custom_call.1} parent=11 // pred_region
          %s230 = ssub.s32 1024, 1024
          %231 = vsyncadd [#allocation7], %s230
          %s232 = sshll.u32 [#allocation8], 4
          %s233 = int_to_ptr.vmem [resolvable:$true] %s232
          %238 = dma.hbm_to_vmem [thread:$0]  %s2, 1024, %s233, [#allocation7], 64, 64, 4
        $region20: #{tpu_custom_call.1} parent=11 // pred_fallthru
          _
      $region12: #{tpu_custom_call.1} parent=5 // pred_fallthru
        _
      %p239 = scmp.lt.s32.totalorder %s26, 2
      // Predicated region
      $region21: #{tpu_custom_call.1} parent=5 // pred_check
        %p240 = pneg %p239
      $region22: #{tpu_custom_call.1} parent=5 // pred_check_branch
        %242 = sbr.rel (%p240) target = $region24
      $region23: #{tpu_custom_call.1} parent=5 // pred_region
        // Predicated region
        $region25: #{tpu_custom_call.1} parent=23 // pred_check
          %p243 = pneg %p46
        $region26: #{tpu_custom_call.1} parent=23 // pred_check_branch
          %245 = sbr.rel (%p243) target = $region28
        $region27: #{tpu_custom_call.1} parent=23 // pred_region
          %s246 = sand.u32 %s36, 1
          %s247 = scalar_lea.sflag [#allocation4], %s246
          %s248 = sand.u32 %s36, 1
          %s249 = smul.addr %s248, 256
          %s250 = scalar_lea.vmem [#allocation3], %s249
          %s252 = ssub.s32 4096, 4096
          %253 = vsyncadd %s247, %s252
          %s254 = smul.addr %s26, 32
          %s255 = smul.addr %s254, 128
          %s256 = scalar_lea.hbm %s0, %s255
          %s257 = sshll.u32 %s250, 4
          %s258 = int_to_ptr.vmem [resolvable:$true] %s257
          %263 = dma.hbm_to_vmem [thread:$0]  %s256, 4096, %s258, %s247, 128, 128, 8
        $region28: #{tpu_custom_call.1} parent=23 // pred_fallthru
          _
      $region24: #{tpu_custom_call.1} parent=5 // pred_fallthru
        _
      %p264 = scmp.le.s32.totalorder 1, %s26
      %p265 = scmp.lt.s32.totalorder %s26, 3
      %p266 = pnand %p264, %p265
      %p267 = pneg %p266
      // Predicated region
      $region29: #{tpu_custom_call.1} parent=5 // pred_check
        _
      $region30: #{tpu_custom_call.1} parent=5 // pred_check_branch
        %269 = sbr.rel (%p266) target = $region32
      $region31: #{tpu_custom_call.1} parent=5 // pred_region
        %s270 = ssub.s32 %s26, 1
        %s271 = sand.u32 %s39, 1
        %s272 = scalar_lea.sflag [#allocation4], %s271
        %s273 = sand.u32 %s39, 1
        %s274 = smul.addr %s273, 256
        %s275 = scalar_lea.vmem [#allocation3], %s274
        // Predicated region
        $region33: #{tpu_custom_call.1} parent=31 // pred_check
          %p276 = pneg %p52
        $region34: #{tpu_custom_call.1} parent=31 // pred_check_branch
          %278 = sbr.rel (%p276) target = $region36
        $region35: #{tpu_custom_call.1} parent=31 // pred_region
          %279 = dma.done %s272, 4096
        $region36: #{tpu_custom_call.1} parent=31 // pred_fallthru
          _
        // Predicated region
        $region37: #{tpu_custom_call.1} parent=31 // pred_check
          %p280 = pneg %p73
        $region38: #{tpu_custom_call.1} parent=31 // pred_check_branch
          %282 = sbr.rel (%p280) target = $region40
        $region39: #{tpu_custom_call.1} parent=31 // pred_region
          %283 = dma.done [#allocation7], 1024
        $region40: #{tpu_custom_call.1} parent=31 // pred_fallthru
          _
        // Predicated region
        $region41: #{tpu_custom_call.1} parent=31 // pred_check
          %p284 = pneg %p94
        $region42: #{tpu_custom_call.1} parent=31 // pred_check_branch
          %286 = sbr.rel (%p284) target = $region44
        $region43: #{tpu_custom_call.1} parent=31 // pred_region
          %287 = dma.done [#allocation7], 1024
        $region44: #{tpu_custom_call.1} parent=31 // pred_fallthru
          _
        %s288 = sand.u32 %s39, 1
        %s289 = scalar_lea.sflag [#allocation4], %s288
        %s290 = sand.u32 %s39, 1
        %s291 = smul.addr %s290, 256
        %s292 = scalar_lea.vmem [#allocation3], %s291
        %p293 = pneg %p52
        %p294 = pneg %p49
        %p295 = pneg %p73
        %p296 = pneg %p70
        %p297 = pneg %p94
        %p298 = pneg %p91
        %p299 = pneg %p120
        %p300 = pneg %p117
        %s301 = sand.u32 %s107, 1
        %s302 = scalar_lea.sflag [#allocation5], %s301
        %s303 = sand.u32 %s107, 1
        %s304 = smul.addr %s303, 128
        %s305 = scalar_lea.vmem [#allocation9], %s304
        %p306 = pneg %p146
        %p307 = pneg %p143
        %s308 = sand.u32 %s31, 1
        %s309 = scalar_lea.sflag [#allocation11], %s308
        %s310 = sand.u32 %s133, 1
        %s311 = smul.addr %s310, 2
        %s312 = scalar_lea.vmem [#allocation10], %s311
        %p313 = pneg %p172
        %p314 = pneg %p169
        %s315 = sand.u32 %s31, 1
        %s316 = scalar_lea.sflag [#allocation11], %s315
        %s317 = sand.u32 %s159, 1
        %s318 = smul.addr %s317, 32
        %s319 = scalar_lea.vmem [#allocation12], %s318
        %p320 = pneg %p198
        %p321 = pneg %p195
        %s322 = sand.u32 %s185, 1
        %s323 = scalar_lea.sflag [#allocation14], %s322
        %s324 = sand.u32 %s185, 1
        %s325 = smul.addr %s324, 2
        %s326 = scalar_lea.vmem [#allocation13], %s325
        %v328 = vld [vmem:[%s275] sm:$0xff]
        %v329 = vld [vmem:[%s275 + $0x8] sm:$0xff]
        %v330 = vld [vmem:[%s275 + $0x10] sm:$0xff]
        %v331 = vld [vmem:[%s275 + $0x18] sm:$0xff]
        %v332 = vld [vmem:[%s275 + $0x20] sm:$0xff]
        %v333 = vld [vmem:[%s275 + $0x28] sm:$0xff]
        %v334 = vld [vmem:[%s275 + $0x30] sm:$0xff]
        %v335 = vld [vmem:[%s275 + $0x38] sm:$0xff]
        %v336 = vld [vmem:[%s275 + $0x40] sm:$0xff]
        %v337 = vld [vmem:[%s275 + $0x48] sm:$0xff]
        %v338 = vld [vmem:[%s275 + $0x50] sm:$0xff]
        %v339 = vld [vmem:[%s275 + $0x58] sm:$0xff]
        %v340 = vld [vmem:[%s275 + $0x60] sm:$0xff]
        %v341 = vld [vmem:[%s275 + $0x68] sm:$0xff]
        %v342 = vld [vmem:[%s275 + $0x70] sm:$0xff]
        %v343 = vld [vmem:[%s275 + $0x78] sm:$0xff]
        %v344 = vld [vmem:[%s275 + $0x80] sm:$0xff]
        %v345 = vld [vmem:[%s275 + $0x88] sm:$0xff]
        %v346 = vld [vmem:[%s275 + $0x90] sm:$0xff]
        %v347 = vld [vmem:[%s275 + $0x98] sm:$0xff]
        %v348 = vld [vmem:[%s275 + $0xa0] sm:$0xff]
        %v349 = vld [vmem:[%s275 + $0xa8] sm:$0xff]
        %v350 = vld [vmem:[%s275 + $0xb0] sm:$0xff]
        %v351 = vld [vmem:[%s275 + $0xb8] sm:$0xff]
        %v352 = vld [vmem:[%s275 + $0xc0] sm:$0xff]
        %v353 = vld [vmem:[%s275 + $0xc8] sm:$0xff]
        %v354 = vld [vmem:[%s275 + $0xd0] sm:$0xff]
        %v355 = vld [vmem:[%s275 + $0xd8] sm:$0xff]
        %v356 = vld [vmem:[%s275 + $0xe0] sm:$0xff]
        %v357 = vld [vmem:[%s275 + $0xe8] sm:$0xff]
        %v358 = vld [vmem:[%s275 + $0xf0] sm:$0xff]
        %v359 = vld [vmem:[%s275 + $0xf8] sm:$0xff]
        %v360 = vpack.c.bf16 %v329, %v328
        %v361 = vpack.c.bf16 %v331, %v330
        %v362 = vpack.c.bf16 %v333, %v332
        %v363 = vpack.c.bf16 %v335, %v334
        %v364 = vpack.c.bf16 %v337, %v336
        %v365 = vpack.c.bf16 %v339, %v338
        %v366 = vpack.c.bf16 %v341, %v340
        %v367 = vpack.c.bf16 %v343, %v342
        %v368 = vpack.c.bf16 %v345, %v344
        %v369 = vpack.c.bf16 %v347, %v346
        %v370 = vpack.c.bf16 %v349, %v348
        %v371 = vpack.c.bf16 %v351, %v350
        %v372 = vpack.c.bf16 %v353, %v352
        %v373 = vpack.c.bf16 %v355, %v354
        %v374 = vpack.c.bf16 %v357, %v356
        %v375 = vpack.c.bf16 %v359, %v358
        %v376 = vld [vmem:[#allocation6] sm:$0xf]
        %v377 = vld [vmem:[#allocation6 + $0x4] sm:$0xf]
        %v378 = vld [vmem:[#allocation6 + $0x8] sm:$0xf]
        %v379 = vld [vmem:[#allocation6 + $0xc] sm:$0xf]
        %v380 = vld [vmem:[#allocation6 + $0x10] sm:$0xf]
        %v381 = vld [vmem:[#allocation6 + $0x14] sm:$0xf]
        %v382 = vld [vmem:[#allocation6 + $0x18] sm:$0xf]
        %v383 = vld [vmem:[#allocation6 + $0x1c] sm:$0xf]
        %v384 = vld [vmem:[#allocation6 + $0x20] sm:$0xf]
        %v385 = vld [vmem:[#allocation6 + $0x24] sm:$0xf]
        %v386 = vld [vmem:[#allocation6 + $0x28] sm:$0xf]
        %v387 = vld [vmem:[#allocation6 + $0x2c] sm:$0xf]
        %v388 = vld [vmem:[#allocation6 + $0x30] sm:$0xf]
        %v389 = vld [vmem:[#allocation6 + $0x34] sm:$0xf]
        %v390 = vld [vmem:[#allocation6 + $0x38] sm:$0xf]
        %v391 = vld [vmem:[#allocation6 + $0x3c] sm:$0xf]
        %v408 = vunpack.c.l.b16 %v376
        %v409 = vunpack.c.l.b16 %v377
        %v410 = vunpack.c.l.b16 %v378
        %v411 = vunpack.c.l.b16 %v379
        %v412 = vunpack.c.l.b16 %v380
        %v413 = vunpack.c.l.b16 %v381
        %v414 = vunpack.c.l.b16 %v382
        %v415 = vunpack.c.l.b16 %v383
        %v416 = vunpack.c.l.b16 %v384
        %v417 = vunpack.c.l.b16 %v385
        %v418 = vunpack.c.l.b16 %v386
        %v419 = vunpack.c.l.b16 %v387
        %v420 = vunpack.c.l.b16 %v388
        %v421 = vunpack.c.l.b16 %v389
        %v422 = vunpack.c.l.b16 %v390
        %v423 = vunpack.c.l.b16 %v391
        %v424 = vpack.c.b16 %v409, %v408
        %v425 = vpack.c.b16 %v411, %v410
        %v426 = vpack.c.b16 %v413, %v412
        %v427 = vpack.c.b16 %v415, %v414
        %v428 = vpack.c.b16 %v417, %v416
        %v429 = vpack.c.b16 %v419, %v418
        %v430 = vpack.c.b16 %v421, %v420
        %v431 = vpack.c.b16 %v423, %v422
        %440 = vmatprep.subr.bf16.mxu0 0
        %441 = vmatpush1.bf16.msra.mxu0 %v431
        %442 = vmatprep.subr.bf16.mxu0 0
        %443 = vmatpush1.bf16.msra.mxu0 %v430
        %444 = vmatprep.subr.bf16.mxu0 0
        %445 = vmatpush1.bf16.msra.mxu0 %v429
        %446 = vmatprep.subr.bf16.mxu0 0
        %447 = vmatpush1.bf16.msra.mxu0 %v428
        %448 = vmatprep.subr.bf16.mxu0 0
        %449 = vmatpush1.bf16.msra.mxu0 %v427
        %450 = vmatprep.subr.bf16.mxu0 0
        %451 = vmatpush1.bf16.msra.mxu0 %v426
        %452 = vmatprep.subr.bf16.mxu0 0
        %453 = vmatpush1.bf16.msra.mxu0 %v425
        %454 = vmatprep.subr.bf16.mxu0 0
        %455 = vmatpush1.bf16.msra.mxu0 %v424
        %456 = vmatprep.subr.bf16.mxu0 0
        %457 = vmatpush2.bf16.msra.mxu0 0
        %458 = vmatprep.subr.bf16.mxu0 0
        %459 = vmatpush2.bf16.msra.mxu0 0
        %460 = vmatprep.subr.bf16.mxu0 0
        %461 = vmatpush2.bf16.msra.mxu0 0
        %462 = vmatprep.subr.bf16.mxu0 0
        %463 = vmatpush2.bf16.msra.mxu0 0
        %464 = vmatprep.subr.bf16.mxu0 0
        %465 = vmatpush2.bf16.msra.mxu0 0
        %466 = vmatprep.subr.bf16.mxu0 0
        %467 = vmatpush2.bf16.msra.mxu0 0
        %468 = vmatprep.subr.bf16.mxu0 0
        %469 = vmatpush2.bf16.msra.mxu0 0
        %470 = vmatprep.subr.bf16.mxu0 0
        %471 = vmatpush2.bf16.msra.mxu0 0
        %472 = vmatprep.mubr.bf16.mxu0 0
        %473 = vmatmul.mubr.bf16.gmra.mxu0 %v360
        %v474 = vpop.f32.mrf.mxu0
        %v475 = vadd.f32 0.0, %v474
        %v476 = vpop.f32.mrf.mxu0
        %v477 = vpop.f32.mrf.mxu0
        %v478 = vadd.f32 0.0, %v477
        %v479 = vpop.f32.mrf.mxu0
        %480 = vmatprep.mubr.bf16.mxu0 0
        %481 = vmatmul.mubr.bf16.gmra.mxu0 %v361
        %v482 = vpop.f32.mrf.mxu0
        %v483 = vadd.f32 0.0, %v482
        %v484 = vpop.f32.mrf.mxu0
        %v485 = vpop.f32.mrf.mxu0
        %v486 = vadd.f32 0.0, %v485
        %v487 = vpop.f32.mrf.mxu0
        %488 = vmatprep.mubr.bf16.mxu0 0
        %489 = vmatmul.mubr.bf16.gmra.mxu0 %v362
        %v490 = vpop.f32.mrf.mxu0
        %v491 = vadd.f32 0.0, %v490
        %v492 = vpop.f32.mrf.mxu0
        %v493 = vpop.f32.mrf.mxu0
        %v494 = vadd.f32 0.0, %v493
        %v495 = vpop.f32.mrf.mxu0
        %496 = vmatprep.mubr.bf16.mxu0 0
        %497 = vmatmul.mubr.bf16.gmra.mxu0 %v363
        %v498 = vpop.f32.mrf.mxu0
        %v499 = vadd.f32 0.0, %v498
        %v500 = vpop.f32.mrf.mxu0
        %v501 = vpop.f32.mrf.mxu0
        %v502 = vadd.f32 0.0, %v501
        %v503 = vpop.f32.mrf.mxu0
        %504 = vmatprep.mubr.bf16.mxu0 0
        %505 = vmatmul.mubr.bf16.gmra.mxu0 %v364
        %v506 = vpop.f32.mrf.mxu0
        %v507 = vadd.f32 0.0, %v506
        %v508 = vpop.f32.mrf.mxu0
        %v509 = vpop.f32.mrf.mxu0
        %v510 = vadd.f32 0.0, %v509
        %v511 = vpop.f32.mrf.mxu0
        %512 = vmatprep.mubr.bf16.mxu0 0
        %513 = vmatmul.mubr.bf16.gmra.mxu0 %v365
        %v514 = vpop.f32.mrf.mxu0
        %v515 = vadd.f32 0.0, %v514
        %v516 = vpop.f32.mrf.mxu0
        %v517 = vpop.f32.mrf.mxu0
        %v518 = vadd.f32 0.0, %v517
        %v519 = vpop.f32.mrf.mxu0
        %520 = vmatprep.mubr.bf16.mxu0 0
        %521 = vmatmul.mubr.bf16.gmra.mxu0 %v366
        %v522 = vpop.f32.mrf.mxu0
        %v523 = vadd.f32 0.0, %v522
        %v524 = vpop.f32.mrf.mxu0
        %v525 = vpop.f32.mrf.mxu0
        %v526 = vadd.f32 0.0, %v525
        %v527 = vpop.f32.mrf.mxu0
        %528 = vmatprep.mubr.bf16.mxu0 0
        %529 = vmatmul.mubr.bf16.gmra.mxu0 %v367
        %v530 = vpop.f32.mrf.mxu0
        %v531 = vadd.f32 0.0, %v530
        %v532 = vpop.f32.mrf.mxu0
        %v533 = vpop.f32.mrf.mxu0
        %v534 = vadd.f32 0.0, %v533
        %v535 = vpop.f32.mrf.mxu0
        %536 = vmatprep.mubr.bf16.mxu0 0
        %537 = vmatmul.mubr.bf16.gmra.mxu0 %v368
        %v538 = vpop.f32.mrf.mxu0
        %v539 = vadd.f32 0.0, %v538
        %v540 = vpop.f32.mrf.mxu0
        %v541 = vpop.f32.mrf.mxu0
        %v542 = vadd.f32 0.0, %v541
        %v543 = vpop.f32.mrf.mxu0
        %544 = vmatprep.mubr.bf16.mxu0 0
        %545 = vmatmul.mubr.bf16.gmra.mxu0 %v369
        %v546 = vpop.f32.mrf.mxu0
        %v547 = vadd.f32 0.0, %v546
        %v548 = vpop.f32.mrf.mxu0
        %v549 = vpop.f32.mrf.mxu0
        %v550 = vadd.f32 0.0, %v549
        %v551 = vpop.f32.mrf.mxu0
        %552 = vmatprep.mubr.bf16.mxu0 0
        %553 = vmatmul.mubr.bf16.gmra.mxu0 %v370
        %v554 = vpop.f32.mrf.mxu0
        %v555 = vadd.f32 0.0, %v554
        %v556 = vpop.f32.mrf.mxu0
        %v557 = vpop.f32.mrf.mxu0
        %v558 = vadd.f32 0.0, %v557
        %v559 = vpop.f32.mrf.mxu0
        %560 = vmatprep.mubr.bf16.mxu0 0
        %561 = vmatmul.mubr.bf16.gmra.mxu0 %v371
        %v562 = vpop.f32.mrf.mxu0
        %v563 = vadd.f32 0.0, %v562
        %v564 = vpop.f32.mrf.mxu0
        %v565 = vpop.f32.mrf.mxu0
        %v566 = vadd.f32 0.0, %v565
        %v567 = vpop.f32.mrf.mxu0
        %568 = vmatprep.mubr.bf16.mxu0 0
        %569 = vmatmul.mubr.bf16.gmra.mxu0 %v372
        %v570 = vpop.f32.mrf.mxu0
        %v571 = vadd.f32 0.0, %v570
        %v572 = vpop.f32.mrf.mxu0
        %v573 = vpop.f32.mrf.mxu0
        %v574 = vadd.f32 0.0, %v573
        %v575 = vpop.f32.mrf.mxu0
        %576 = vmatprep.mubr.bf16.mxu0 0
        %577 = vmatmul.mubr.bf16.gmra.mxu0 %v373
        %v578 = vpop.f32.mrf.mxu0
        %v579 = vadd.f32 0.0, %v578
        %v580 = vpop.f32.mrf.mxu0
        %v581 = vpop.f32.mrf.mxu0
        %v582 = vadd.f32 0.0, %v581
        %v583 = vpop.f32.mrf.mxu0
        %584 = vmatprep.mubr.bf16.mxu0 0
        %585 = vmatmul.mubr.bf16.gmra.mxu0 %v374
        %v586 = vpop.f32.mrf.mxu0
        %v587 = vadd.f32 0.0, %v586
        %v588 = vpop.f32.mrf.mxu0
        %v589 = vpop.f32.mrf.mxu0
        %v590 = vadd.f32 0.0, %v589
        %v591 = vpop.f32.mrf.mxu0
        %592 = vmatprep.mubr.bf16.mxu0 0
        %593 = vmatmul.mubr.bf16.gmra.mxu0 %v375
        %v594 = vpop.f32.mrf.mxu0
        %v595 = vadd.f32 0.0, %v594
        %v596 = vpop.f32.mrf.mxu0
        %v597 = vpop.f32.mrf.mxu0
        %v598 = vadd.f32 0.0, %v597
        %v599 = vpop.f32.mrf.mxu0
        %600 = vdwg.mxu0
        %v601 = vadd.f32 %v475, %v478
        %v602 = vadd.f32 %v601, %v483
        %v603 = vadd.f32 %v602, %v486
        %v604 = vadd.f32 %v603, %v491
        %v605 = vadd.f32 %v604, %v494
        %v606 = vadd.f32 %v605, %v499
        %v607 = vadd.f32 %v606, %v502
        %v608 = vadd.f32 %v607, %v507
        %v609 = vadd.f32 %v608, %v510
        %v610 = vadd.f32 %v609, %v515
        %v611 = vadd.f32 %v610, %v518
        %v612 = vadd.f32 %v611, %v523
        %v613 = vadd.f32 %v612, %v526
        %v614 = vadd.f32 %v613, %v531
        %v615 = vadd.f32 %v614, %v534
        %v616 = vadd.f32 %v615, %v539
        %v617 = vadd.f32 %v616, %v542
        %v618 = vadd.f32 %v617, %v547
        %v619 = vadd.f32 %v618, %v550
        %v620 = vadd.f32 %v619, %v555
        %v621 = vadd.f32 %v620, %v558
        %v622 = vadd.f32 %v621, %v563
        %v623 = vadd.f32 %v622, %v566
        %v624 = vadd.f32 %v623, %v571
        %v625 = vadd.f32 %v624, %v574
        %v626 = vadd.f32 %v625, %v579
        %v627 = vadd.f32 %v626, %v582
        %v628 = vadd.f32 %v627, %v587
        %v629 = vadd.f32 %v628, %v590
        %v630 = vadd.f32 %v629, %v595
        %v631 = vadd.f32 %v630, %v598
        %v632 = vrot.slane %v631, 4
        %v633 = vadd.f32 %v631, %v632
        %v634 = vrot.slane %v633, 2
        %v635 = vadd.f32 %v633, %v634
        %v636 = vrot.slane %v635, 1
        %v637 = vadd.f32 %v635, %v636
        %v638 = vmul.f32 %v475, %v475
        %v639 = vmul.f32 %v478, %v478
        %v640 = vmul.f32 %v483, %v483
        %v641 = vmul.f32 %v486, %v486
        %v642 = vmul.f32 %v491, %v491
        %v643 = vmul.f32 %v494, %v494
        %v644 = vmul.f32 %v499, %v499
        %v645 = vmul.f32 %v502, %v502
        %v646 = vmul.f32 %v507, %v507
        %v647 = vmul.f32 %v510, %v510
        %v648 = vmul.f32 %v515, %v515
        %v649 = vmul.f32 %v518, %v518
        %v650 = vmul.f32 %v523, %v523
        %v651 = vmul.f32 %v526, %v526
        %v652 = vmul.f32 %v531, %v531
        %v653 = vmul.f32 %v534, %v534
        %v654 = vmul.f32 %v539, %v539
        %v655 = vmul.f32 %v542, %v542
        %v656 = vmul.f32 %v547, %v547
        %v657 = vmul.f32 %v550, %v550
        %v658 = vmul.f32 %v555, %v555
        %v659 = vmul.f32 %v558, %v558
        %v660 = vmul.f32 %v563, %v563
        %v661 = vmul.f32 %v566, %v566
        %v662 = vmul.f32 %v571, %v571
        %v663 = vmul.f32 %v574, %v574
        %v664 = vmul.f32 %v579, %v579
        %v665 = vmul.f32 %v582, %v582
        %v666 = vmul.f32 %v587, %v587
        %v667 = vmul.f32 %v590, %v590
        %v668 = vmul.f32 %v595, %v595
        %v669 = vmul.f32 %v598, %v598
        %v670 = vadd.f32 %v638, %v639
        %v671 = vadd.f32 %v670, %v640
        %v672 = vadd.f32 %v671, %v641
        %v673 = vadd.f32 %v672, %v642
        %v674 = vadd.f32 %v673, %v643
        %v675 = vadd.f32 %v674, %v644
        %v676 = vadd.f32 %v675, %v645
        %v677 = vadd.f32 %v676, %v646
        %v678 = vadd.f32 %v677, %v647
        %v679 = vadd.f32 %v678, %v648
        %v680 = vadd.f32 %v679, %v649
        %v681 = vadd.f32 %v680, %v650
        %v682 = vadd.f32 %v681, %v651
        %v683 = vadd.f32 %v682, %v652
        %v684 = vadd.f32 %v683, %v653
        %v685 = vadd.f32 %v684, %v654
        %v686 = vadd.f32 %v685, %v655
        %v687 = vadd.f32 %v686, %v656
        %v688 = vadd.f32 %v687, %v657
        %v689 = vadd.f32 %v688, %v658
        %v690 = vadd.f32 %v689, %v659
        %v691 = vadd.f32 %v690, %v660
        %v692 = vadd.f32 %v691, %v661
        %v693 = vadd.f32 %v692, %v662
        %v694 = vadd.f32 %v693, %v663
        %v695 = vadd.f32 %v694, %v664
        %v696 = vadd.f32 %v695, %v665
        %v697 = vadd.f32 %v696, %v666
        %v698 = vadd.f32 %v697, %v667
        %v699 = vadd.f32 %v698, %v668
        %v700 = vadd.f32 %v699, %v669
        %v701 = vrot.slane %v700, 4
        %v702 = vadd.f32 %v700, %v701
        %v703 = vrot.slane %v702, 2
        %v704 = vadd.f32 %v702, %v703
        %v705 = vrot.slane %v704, 1
        %v706 = vadd.f32 %v704, %v705
        %vm707 = vcmask 1040384
        %v708 = vsel %vm707, %v637, %v706
        %709 = vst [vmem:[%s312] sm:$0x3] %v708
        %v710 = vpack.c.bf16 %v478, %v475
        %v711 = vpack.c.bf16 %v486, %v483
        %v712 = vpack.c.bf16 %v494, %v491
        %v713 = vpack.c.bf16 %v502, %v499
        %v714 = vpack.c.bf16 %v510, %v507
        %v715 = vpack.c.bf16 %v518, %v515
        %v716 = vpack.c.bf16 %v526, %v523
        %v717 = vpack.c.bf16 %v534, %v531
        %v718 = vpack.c.bf16 %v542, %v539
        %v719 = vpack.c.bf16 %v550, %v547
        %v720 = vpack.c.bf16 %v558, %v555
        %v721 = vpack.c.bf16 %v566, %v563
        %v722 = vpack.c.bf16 %v574, %v571
        %v723 = vpack.c.bf16 %v582, %v579
        %v724 = vpack.c.bf16 %v590, %v587
        %v725 = vpack.c.bf16 %v598, %v595
        %v742 = vunpack.c.l.b16 %v710
        %v743 = vunpack.c.h.b16 %v710
        %v744 = vunpack.c.l.b16 %v711
        %v745 = vunpack.c.h.b16 %v711
        %v746 = vunpack.c.l.b16 %v712
        %v747 = vunpack.c.h.b16 %v712
        %v748 = vunpack.c.l.b16 %v713
        %v749 = vunpack.c.h.b16 %v713
        %v750 = vunpack.c.l.b16 %v714
        %v751 = vunpack.c.h.b16 %v714
        %v752 = vunpack.c.l.b16 %v715
        %v753 = vunpack.c.h.b16 %v715
        %v754 = vunpack.c.l.b16 %v716
        %v755 = vunpack.c.h.b16 %v716
        %v756 = vunpack.c.l.b16 %v717
        %v757 = vunpack.c.h.b16 %v717
        %v758 = vunpack.c.l.b16 %v718
        %v759 = vunpack.c.h.b16 %v718
        %v760 = vunpack.c.l.b16 %v719
        %v761 = vunpack.c.h.b16 %v719
        %v762 = vunpack.c.l.b16 %v720
        %v763 = vunpack.c.h.b16 %v720
        %v764 = vunpack.c.l.b16 %v721
        %v765 = vunpack.c.h.b16 %v721
        %v766 = vunpack.c.l.b16 %v722
        %v767 = vunpack.c.h.b16 %v722
        %v768 = vunpack.c.l.b16 %v723
        %v769 = vunpack.c.h.b16 %v723
        %v770 = vunpack.c.l.b16 %v724
        %v771 = vunpack.c.h.b16 %v724
        %v772 = vunpack.c.l.b16 %v725
        %v773 = vunpack.c.h.b16 %v725
        %v774 = vpack.c.b16 %v742, %v742
        %v775 = vpack.c.b16 %v743, %v743
        %v776 = vpack.c.b16 %v744, %v744
        %v777 = vpack.c.b16 %v745, %v745
        %v778 = vpack.c.b16 %v746, %v746
        %v779 = vpack.c.b16 %v747, %v747
        %v780 = vpack.c.b16 %v748, %v748
        %v781 = vpack.c.b16 %v749, %v749
        %v782 = vpack.c.b16 %v750, %v750
        %v783 = vpack.c.b16 %v751, %v751
        %v784 = vpack.c.b16 %v752, %v752
        %v785 = vpack.c.b16 %v753, %v753
        %v786 = vpack.c.b16 %v754, %v754
        %v787 = vpack.c.b16 %v755, %v755
        %v788 = vpack.c.b16 %v756, %v756
        %v789 = vpack.c.b16 %v757, %v757
        %v790 = vpack.c.b16 %v758, %v758
        %v791 = vpack.c.b16 %v759, %v759
        %v792 = vpack.c.b16 %v760, %v760
        %v793 = vpack.c.b16 %v761, %v761
        %v794 = vpack.c.b16 %v762, %v762
        %v795 = vpack.c.b16 %v763, %v763
        %v796 = vpack.c.b16 %v764, %v764
        %v797 = vpack.c.b16 %v765, %v765
        %v798 = vpack.c.b16 %v766, %v766
        %v799 = vpack.c.b16 %v767, %v767
        %v800 = vpack.c.b16 %v768, %v768
        %v801 = vpack.c.b16 %v769, %v769
        %v802 = vpack.c.b16 %v770, %v770
        %v803 = vpack.c.b16 %v771, %v771
        %v804 = vpack.c.b16 %v772, %v772
        %v805 = vpack.c.b16 %v773, %v773
        %838 = vst [vmem:[%s305] sm:$0xf] %v774
        %839 = vst [vmem:[%s305 + $0x4] sm:$0xf] %v775
        %840 = vst [vmem:[%s305 + $0x8] sm:$0xf] %v776
        %841 = vst [vmem:[%s305 + $0xc] sm:$0xf] %v777
        %842 = vst [vmem:[%s305 + $0x10] sm:$0xf] %v778
        %843 = vst [vmem:[%s305 + $0x14] sm:$0xf] %v779
        %844 = vst [vmem:[%s305 + $0x18] sm:$0xf] %v780
        %845 = vst [vmem:[%s305 + $0x1c] sm:$0xf] %v781
        %846 = vst [vmem:[%s305 + $0x20] sm:$0xf] %v782
        %847 = vst [vmem:[%s305 + $0x24] sm:$0xf] %v783
        %848 = vst [vmem:[%s305 + $0x28] sm:$0xf] %v784
        %849 = vst [vmem:[%s305 + $0x2c] sm:$0xf] %v785
        %850 = vst [vmem:[%s305 + $0x30] sm:$0xf] %v786
        %851 = vst [vmem:[%s305 + $0x34] sm:$0xf] %v787
        %852 = vst [vmem:[%s305 + $0x38] sm:$0xf] %v788
        %853 = vst [vmem:[%s305 + $0x3c] sm:$0xf] %v789
        %854 = vst [vmem:[%s305 + $0x40] sm:$0xf] %v790
        %855 = vst [vmem:[%s305 + $0x44] sm:$0xf] %v791
        %856 = vst [vmem:[%s305 + $0x48] sm:$0xf] %v792
        %857 = vst [vmem:[%s305 + $0x4c] sm:$0xf] %v793
        %858 = vst [vmem:[%s305 + $0x50] sm:$0xf] %v794
        %859 = vst [vmem:[%s305 + $0x54] sm:$0xf] %v795
        %860 = vst [vmem:[%s305 + $0x58] sm:$0xf] %v796
        %861 = vst [vmem:[%s305 + $0x5c] sm:$0xf] %v797
        %862 = vst [vmem:[%s305 + $0x60] sm:$0xf] %v798
        %863 = vst [vmem:[%s305 + $0x64] sm:$0xf] %v799
        %864 = vst [vmem:[%s305 + $0x68] sm:$0xf] %v800
        %865 = vst [vmem:[%s305 + $0x6c] sm:$0xf] %v801
        %866 = vst [vmem:[%s305 + $0x70] sm:$0xf] %v802
        %867 = vst [vmem:[%s305 + $0x74] sm:$0xf] %v803
        %868 = vst [vmem:[%s305 + $0x78] sm:$0xf] %v804
        %869 = vst [vmem:[%s305 + $0x7c] sm:$0xf] %v805
        %v870 = vld [vmem:[%s275] ss:$2 sm:$0xff]
        %s871 = scalar_lea.vmem %s275, 16 [#allocation3]
        %v872 = vld [vmem:[%s871] ss:$2 sm:$0xff]
        %s873 = scalar_lea.vmem %s275, 32 [#allocation3]
        %v874 = vld [vmem:[%s873] ss:$2 sm:$0xff]
        %s875 = scalar_lea.vmem %s275, 48 [#allocation3]
        %v876 = vld [vmem:[%s875] ss:$2 sm:$0xff]
        %s877 = scalar_lea.vmem %s275, 64 [#allocation3]
        %v878 = vld [vmem:[%s877] ss:$2 sm:$0xff]
        %s879 = scalar_lea.vmem %s275, 80 [#allocation3]
        %v880 = vld [vmem:[%s879] ss:$2 sm:$0xff]
        %s881 = scalar_lea.vmem %s275, 96 [#allocation3]
        %v882 = vld [vmem:[%s881] ss:$2 sm:$0xff]
        %s883 = scalar_lea.vmem %s275, 112 [#allocation3]
        %v884 = vld [vmem:[%s883] ss:$2 sm:$0xff]
        %s885 = scalar_lea.vmem %s275, 128 [#allocation3]
        %v886 = vld [vmem:[%s885] ss:$2 sm:$0xff]
        %s887 = scalar_lea.vmem %s275, 144 [#allocation3]
        %v888 = vld [vmem:[%s887] ss:$2 sm:$0xff]
        %s889 = scalar_lea.vmem %s275, 160 [#allocation3]
        %v890 = vld [vmem:[%s889] ss:$2 sm:$0xff]
        %s891 = scalar_lea.vmem %s275, 176 [#allocation3]
        %v892 = vld [vmem:[%s891] ss:$2 sm:$0xff]
        %s893 = scalar_lea.vmem %s275, 192 [#allocation3]
        %v894 = vld [vmem:[%s893] ss:$2 sm:$0xff]
        %s895 = scalar_lea.vmem %s275, 208 [#allocation3]
        %v896 = vld [vmem:[%s895] ss:$2 sm:$0xff]
        %s897 = scalar_lea.vmem %s275, 224 [#allocation3]
        %v898 = vld [vmem:[%s897] ss:$2 sm:$0xff]
        %s899 = scalar_lea.vmem %s275, 240 [#allocation3]
        %v900 = vld [vmem:[%s899] ss:$2 sm:$0xff]
        %s901 = scalar_lea.vmem %s275, 1 [#allocation3]
        %v902 = vld [vmem:[%s901] ss:$2 sm:$0xff]
        %s903 = scalar_lea.vmem %s275, 17 [#allocation3]
        %v904 = vld [vmem:[%s903] ss:$2 sm:$0xff]
        %s905 = scalar_lea.vmem %s275, 33 [#allocation3]
        %v906 = vld [vmem:[%s905] ss:$2 sm:$0xff]
        %s907 = scalar_lea.vmem %s275, 49 [#allocation3]
        %v908 = vld [vmem:[%s907] ss:$2 sm:$0xff]
        %s909 = scalar_lea.vmem %s275, 65 [#allocation3]
        %v910 = vld [vmem:[%s909] ss:$2 sm:$0xff]
        %s911 = scalar_lea.vmem %s275, 81 [#allocation3]
        %v912 = vld [vmem:[%s911] ss:$2 sm:$0xff]
        %s913 = scalar_lea.vmem %s275, 97 [#allocation3]
        %v914 = vld [vmem:[%s913] ss:$2 sm:$0xff]
        %s915 = scalar_lea.vmem %s275, 113 [#allocation3]
        %v916 = vld [vmem:[%s915] ss:$2 sm:$0xff]
        %s917 = scalar_lea.vmem %s275, 129 [#allocation3]
        %v918 = vld [vmem:[%s917] ss:$2 sm:$0xff]
        %s919 = scalar_lea.vmem %s275, 145 [#allocation3]
        %v920 = vld [vmem:[%s919] ss:$2 sm:$0xff]
        %s921 = scalar_lea.vmem %s275, 161 [#allocation3]
        %v922 = vld [vmem:[%s921] ss:$2 sm:$0xff]
        %s923 = scalar_lea.vmem %s275, 177 [#allocation3]
        %v924 = vld [vmem:[%s923] ss:$2 sm:$0xff]
        %s925 = scalar_lea.vmem %s275, 193 [#allocation3]
        %v926 = vld [vmem:[%s925] ss:$2 sm:$0xff]
        %s927 = scalar_lea.vmem %s275, 209 [#allocation3]
        %v928 = vld [vmem:[%s927] ss:$2 sm:$0xff]
        %s929 = scalar_lea.vmem %s275, 225 [#allocation3]
        %v930 = vld [vmem:[%s929] ss:$2 sm:$0xff]
        %s931 = scalar_lea.vmem %s275, 241 [#allocation3]
        %v932 = vld [vmem:[%s931] ss:$2 sm:$0xff]
        %v933 = vadd.f32 %v870, %v902
        %v934 = vadd.f32 %v872, %v904
        %v935 = vadd.f32 %v874, %v906
        %v936 = vadd.f32 %v876, %v908
        %v937 = vadd.f32 %v878, %v910
        %v938 = vadd.f32 %v880, %v912
        %v939 = vadd.f32 %v882, %v914
        %v940 = vadd.f32 %v884, %v916
        %v941 = vadd.f32 %v886, %v918
        %v942 = vadd.f32 %v888, %v920
        %v943 = vadd.f32 %v890, %v922
        %v944 = vadd.f32 %v892, %v924
        %v945 = vadd.f32 %v894, %v926
        %v946 = vadd.f32 %v896, %v928
        %v947 = vadd.f32 %v898, %v930
        %v948 = vadd.f32 %v900, %v932
        %949 = vst [vmem:[#allocation2] sm:$0xff] %v933
        %950 = vst [vmem:[#allocation2 + $0x8] sm:$0xff] %v934
        %951 = vst [vmem:[#allocation2 + $0x10] sm:$0xff] %v935
        %952 = vst [vmem:[#allocation2 + $0x18] sm:$0xff] %v936
        %953 = vst [vmem:[#allocation2 + $0x20] sm:$0xff] %v937
        %954 = vst [vmem:[#allocation2 + $0x28] sm:$0xff] %v938
        %955 = vst [vmem:[#allocation2 + $0x30] sm:$0xff] %v939
        %956 = vst [vmem:[#allocation2 + $0x38] sm:$0xff] %v940
        %957 = vst [vmem:[#allocation2 + $0x40] sm:$0xff] %v941
        %958 = vst [vmem:[#allocation2 + $0x48] sm:$0xff] %v942
        %959 = vst [vmem:[#allocation2 + $0x50] sm:$0xff] %v943
        %960 = vst [vmem:[#allocation2 + $0x58] sm:$0xff] %v944
        %961 = vst [vmem:[#allocation2 + $0x60] sm:$0xff] %v945
        %962 = vst [vmem:[#allocation2 + $0x68] sm:$0xff] %v946
        %963 = vst [vmem:[#allocation2 + $0x70] sm:$0xff] %v947
        %964 = vst [vmem:[#allocation2 + $0x78] sm:$0xff] %v948
        %v965 = vld [vmem:[#allocation2] sm:$0xff]
        %v966 = vld [vmem:[#allocation2 + $0x10] sm:$0xff]
        %v967 = vld [vmem:[#allocation2 + $0x20] sm:$0xff]
        %v968 = vld [vmem:[#allocation2 + $0x30] sm:$0xff]
        %v969 = vld [vmem:[#allocation2 + $0x40] sm:$0xff]
        %v970 = vld [vmem:[#allocation2 + $0x50] sm:$0xff]
        %v971 = vld [vmem:[#allocation2 + $0x60] sm:$0xff]
        %v972 = vld [vmem:[#allocation2 + $0x70] sm:$0xff]
        %s973 = scalar_lea.vmem [#allocation2], 8
        %v974 = vld [vmem:[%s973] sm:$0xff]
        %v975 = vld [vmem:[%s973 + $0x10] sm:$0xff]
        %v976 = vld [vmem:[%s973 + $0x20] sm:$0xff]
        %v977 = vld [vmem:[%s973 + $0x30] sm:$0xff]
        %v978 = vld [vmem:[%s973 + $0x40] sm:$0xff]
        %v979 = vld [vmem:[%s973 + $0x50] sm:$0xff]
        %v980 = vld [vmem:[%s973 + $0x60] sm:$0xff]
        %v981 = vld [vmem:[%s973 + $0x70] sm:$0xff]
        %v982 = vadd.f32 %v965, %v974
        %v983 = vadd.f32 %v966, %v975
        %v984 = vadd.f32 %v967, %v976
        %v985 = vadd.f32 %v968, %v977
        %v986 = vadd.f32 %v969, %v978
        %v987 = vadd.f32 %v970, %v979
        %v988 = vadd.f32 %v971, %v980
        %v989 = vadd.f32 %v972, %v981
        %v990 = vmul.f32 %v982, 0.25
        %v991 = vmul.f32 %v983, 0.25
        %v992 = vmul.f32 %v984, 0.25
        %v993 = vmul.f32 %v985, 0.25
        %v994 = vmul.f32 %v986, 0.25
        %v995 = vmul.f32 %v987, 0.25
        %v996 = vmul.f32 %v988, 0.25
        %v997 = vmul.f32 %v989, 0.25
        %v998 = vpack.c.bf16 %v991, %v990
        %v999 = vpack.c.bf16 %v993, %v992
        %v1000 = vpack.c.bf16 %v995, %v994
        %v1001 = vpack.c.bf16 %v997, %v996
        %v1002 = vld [vmem:[#allocation8] sm:$0xf]
        %v1003 = vld [vmem:[#allocation8 + $0x4] sm:$0xf]
        %v1004 = vld [vmem:[#allocation8 + $0x8] sm:$0xf]
        %v1005 = vld [vmem:[#allocation8 + $0xc] sm:$0xf]
        %v1006 = vld [vmem:[#allocation8 + $0x10] sm:$0xf]
        %v1007 = vld [vmem:[#allocation8 + $0x14] sm:$0xf]
        %v1008 = vld [vmem:[#allocation8 + $0x18] sm:$0xf]
        %v1009 = vld [vmem:[#allocation8 + $0x1c] sm:$0xf]
        %v1010 = vld [vmem:[#allocation8 + $0x20] sm:$0xf]
        %v1011 = vld [vmem:[#allocation8 + $0x24] sm:$0xf]
        %v1012 = vld [vmem:[#allocation8 + $0x28] sm:$0xf]
        %v1013 = vld [vmem:[#allocation8 + $0x2c] sm:$0xf]
        %v1014 = vld [vmem:[#allocation8 + $0x30] sm:$0xf]
        %v1015 = vld [vmem:[#allocation8 + $0x34] sm:$0xf]
        %v1016 = vld [vmem:[#allocation8 + $0x38] sm:$0xf]
        %v1017 = vld [vmem:[#allocation8 + $0x3c] sm:$0xf]
        %v1034 = vunpack.c.l.b16 %v1002
        %v1035 = vunpack.c.l.b16 %v1003
        %v1036 = vunpack.c.l.b16 %v1004
        %v1037 = vunpack.c.l.b16 %v1005
        %v1038 = vunpack.c.l.b16 %v1006
        %v1039 = vunpack.c.l.b16 %v1007
        %v1040 = vunpack.c.l.b16 %v1008
        %v1041 = vunpack.c.l.b16 %v1009
        %v1042 = vunpack.c.l.b16 %v1010
        %v1043 = vunpack.c.l.b16 %v1011
        %v1044 = vunpack.c.l.b16 %v1012
        %v1045 = vunpack.c.l.b16 %v1013
        %v1046 = vunpack.c.l.b16 %v1014
        %v1047 = vunpack.c.l.b16 %v1015
        %v1048 = vunpack.c.l.b16 %v1016
        %v1049 = vunpack.c.l.b16 %v1017
        %v1050 = vpack.c.b16 %v1035, %v1034
        %v1051 = vpack.c.b16 %v1037, %v1036
        %v1052 = vpack.c.b16 %v1039, %v1038
        %v1053 = vpack.c.b16 %v1041, %v1040
        %v1054 = vpack.c.b16 %v1043, %v1042
        %v1055 = vpack.c.b16 %v1045, %v1044
        %v1056 = vpack.c.b16 %v1047, %v1046
        %v1057 = vpack.c.b16 %v1049, %v1048
        %1066 = vmatprep.subr.bf16.mxu0 0
        %1067 = vmatpush1.bf16.msra.mxu0 %v1057
        %1068 = vmatprep.subr.bf16.mxu0 0
        %1069 = vmatpush1.bf16.msra.mxu0 %v1056
        %1070 = vmatprep.subr.bf16.mxu0 0
        %1071 = vmatpush1.bf16.msra.mxu0 %v1055
        %1072 = vmatprep.subr.bf16.mxu0 0
        %1073 = vmatpush1.bf16.msra.mxu0 %v1054
        %1074 = vmatprep.subr.bf16.mxu0 0
        %1075 = vmatpush1.bf16.msra.mxu0 %v1053
        %1076 = vmatprep.subr.bf16.mxu0 0
        %1077 = vmatpush1.bf16.msra.mxu0 %v1052
        %1078 = vmatprep.subr.bf16.mxu0 0
        %1079 = vmatpush1.bf16.msra.mxu0 %v1051
        %1080 = vmatprep.subr.bf16.mxu0 0
        %1081 = vmatpush1.bf16.msra.mxu0 %v1050
        %1082 = vmatprep.subr.bf16.mxu0 0
        %1083 = vmatpush2.bf16.msra.mxu0 0
        %1084 = vmatprep.subr.bf16.mxu0 0
        %1085 = vmatpush2.bf16.msra.mxu0 0
        %1086 = vmatprep.subr.bf16.mxu0 0
        %1087 = vmatpush2.bf16.msra.mxu0 0
        %1088 = vmatprep.subr.bf16.mxu0 0
        %1089 = vmatpush2.bf16.msra.mxu0 0
        %1090 = vmatprep.subr.bf16.mxu0 0
        %1091 = vmatpush2.bf16.msra.mxu0 0
        %1092 = vmatprep.subr.bf16.mxu0 0
        %1093 = vmatpush2.bf16.msra.mxu0 0
        %1094 = vmatprep.subr.bf16.mxu0 0
        %1095 = vmatpush2.bf16.msra.mxu0 0
        %1096 = vmatprep.subr.bf16.mxu0 0
        %1097 = vmatpush2.bf16.msra.mxu0 0
        %1098 = vmatprep.mubr.bf16.mxu0 0
        %1099 = vmatmul.mubr.bf16.gmra.mxu0 %v998
        %v1100 = vpop.f32.mrf.mxu0
        %v1101 = vadd.f32 0.0, %v1100
        %v1102 = vpop.f32.mrf.mxu0
        %v1103 = vpop.f32.mrf.mxu0
        %v1104 = vadd.f32 0.0, %v1103
        %v1105 = vpop.f32.mrf.mxu0
        %1106 = vmatprep.mubr.bf16.mxu0 0
        %1107 = vmatmul.mubr.bf16.gmra.mxu0 %v999
        %v1108 = vpop.f32.mrf.mxu0
        %v1109 = vadd.f32 0.0, %v1108
        %v1110 = vpop.f32.mrf.mxu0
        %v1111 = vpop.f32.mrf.mxu0
        %v1112 = vadd.f32 0.0, %v1111
        %v1113 = vpop.f32.mrf.mxu0
        %1114 = vmatprep.mubr.bf16.mxu0 0
        %1115 = vmatmul.mubr.bf16.gmra.mxu0 %v1000
        %v1116 = vpop.f32.mrf.mxu0
        %v1117 = vadd.f32 0.0, %v1116
        %v1118 = vpop.f32.mrf.mxu0
        %v1119 = vpop.f32.mrf.mxu0
        %v1120 = vadd.f32 0.0, %v1119
        %v1121 = vpop.f32.mrf.mxu0
        %1122 = vmatprep.mubr.bf16.mxu0 0
        %1123 = vmatmul.mubr.bf16.gmra.mxu0 %v1001
        %v1124 = vpop.f32.mrf.mxu0
        %v1125 = vadd.f32 0.0, %v1124
        %v1126 = vpop.f32.mrf.mxu0
        %v1127 = vpop.f32.mrf.mxu0
        %v1128 = vadd.f32 0.0, %v1127
        %v1129 = vpop.f32.mrf.mxu0
        %1130 = vdwg.mxu0
        %v1131 = vadd.f32 %v1101, %v1104
        %v1132 = vadd.f32 %v1131, %v1109
        %v1133 = vadd.f32 %v1132, %v1112
        %v1134 = vadd.f32 %v1133, %v1117
        %v1135 = vadd.f32 %v1134, %v1120
        %v1136 = vadd.f32 %v1135, %v1125
        %v1137 = vadd.f32 %v1136, %v1128
        %v1138 = vrot.slane %v1137, 4
        %v1139 = vadd.f32 %v1137, %v1138
        %v1140 = vrot.slane %v1139, 2
        %v1141 = vadd.f32 %v1139, %v1140
        %v1142 = vrot.slane %v1141, 1
        %v1143 = vadd.f32 %v1141, %v1142
        %v1144 = vmul.f32 %v1101, %v1101
        %v1145 = vmul.f32 %v1104, %v1104
        %v1146 = vmul.f32 %v1109, %v1109
        %v1147 = vmul.f32 %v1112, %v1112
        %v1148 = vmul.f32 %v1117, %v1117
        %v1149 = vmul.f32 %v1120, %v1120
        %v1150 = vmul.f32 %v1125, %v1125
        %v1151 = vmul.f32 %v1128, %v1128
        %v1152 = vadd.f32 %v1144, %v1145
        %v1153 = vadd.f32 %v1152, %v1146
        %v1154 = vadd.f32 %v1153, %v1147
        %v1155 = vadd.f32 %v1154, %v1148
        %v1156 = vadd.f32 %v1155, %v1149
        %v1157 = vadd.f32 %v1156, %v1150
        %v1158 = vadd.f32 %v1157, %v1151
        %v1159 = vrot.slane %v1158, 4
        %v1160 = vadd.f32 %v1158, %v1159
        %v1161 = vrot.slane %v1160, 2
        %v1162 = vadd.f32 %v1160, %v1161
        %v1163 = vrot.slane %v1162, 1
        %v1164 = vadd.f32 %v1162, %v1163
        %v1165 = vsel %vm707, %v1143, %v1164
        %1166 = vst [vmem:[%s326] sm:$0x3] %v1165
        %v1167 = vpack.c.bf16 %v1104, %v1101
        %v1168 = vpack.c.bf16 %v1112, %v1109
        %v1169 = vpack.c.bf16 %v1120, %v1117
        %v1170 = vpack.c.bf16 %v1128, %v1125
        %v1175 = vunpack.c.l.b16 %v1167
        %v1176 = vunpack.c.h.b16 %v1167
        %v1177 = vunpack.c.l.b16 %v1168
        %v1178 = vunpack.c.h.b16 %v1168
        %v1179 = vunpack.c.l.b16 %v1169
        %v1180 = vunpack.c.h.b16 %v1169
        %v1181 = vunpack.c.l.b16 %v1170
        %v1182 = vunpack.c.h.b16 %v1170
        %v1183 = vpack.c.b16 %v1175, %v1175
        %v1184 = vpack.c.b16 %v1176, %v1176
        %v1185 = vpack.c.b16 %v1177, %v1177
        %v1186 = vpack.c.b16 %v1178, %v1178
        %v1187 = vpack.c.b16 %v1179, %v1179
        %v1188 = vpack.c.b16 %v1180, %v1180
        %v1189 = vpack.c.b16 %v1181, %v1181
        %v1190 = vpack.c.b16 %v1182, %v1182
        %1199 = vst [vmem:[%s319] sm:$0xf] %v1183
        %1200 = vst [vmem:[%s319 + $0x4] sm:$0xf] %v1184
        %1201 = vst [vmem:[%s319 + $0x8] sm:$0xf] %v1185
        %1202 = vst [vmem:[%s319 + $0xc] sm:$0xf] %v1186
        %1203 = vst [vmem:[%s319 + $0x10] sm:$0xf] %v1187
        %1204 = vst [vmem:[%s319 + $0x14] sm:$0xf] %v1188
        %1205 = vst [vmem:[%s319 + $0x18] sm:$0xf] %v1189
        %1206 = vst [vmem:[%s319 + $0x1c] sm:$0xf] %v1190
        %s1207 = sand.u32 %s107, 1
        %s1208 = scalar_lea.sflag [#allocation5], %s1207
        %s1209 = sand.u32 %s107, 1
        %s1210 = smul.addr %s1209, 128
        %s1211 = scalar_lea.vmem [#allocation9], %s1210
        %s1212 = sand.u32 %s31, 1
        %s1213 = scalar_lea.sflag [#allocation11], %s1212
        %s1214 = sand.u32 %s133, 1
        %s1215 = smul.addr %s1214, 2
        %s1216 = scalar_lea.vmem [#allocation10], %s1215
        %s1217 = sand.u32 %s31, 1
        %s1218 = scalar_lea.sflag [#allocation11], %s1217
        %s1219 = sand.u32 %s159, 1
        %s1220 = smul.addr %s1219, 32
        %s1221 = scalar_lea.vmem [#allocation12], %s1220
        %s1222 = sand.u32 %s185, 1
        %s1223 = scalar_lea.sflag [#allocation14], %s1222
        %s1224 = sand.u32 %s185, 1
        %s1225 = smul.addr %s1224, 2
        %s1226 = scalar_lea.vmem [#allocation13], %s1225
        // Predicated region
        $region45: #{tpu_custom_call.1} parent=31 // pred_check
          %p1227 = pneg %p117
        $region46: #{tpu_custom_call.1} parent=31 // pred_check_branch
          %1229 = sbr.rel (%p1227) target = $region48
        $region47: #{tpu_custom_call.1} parent=31 // pred_region
          %s1231 = ssub.s32 2048, 2048
          %1232 = vsyncadd %s1208, %s1231
          %s1233 = smul.addr %s31, 32
          %s1234 = smul.addr %s1233, 64
          %s1235 = scalar_lea.hbm %s3, %s1234
          %s1236 = sshll.u32 %s1211, 4
          %s1237 = int_to_ptr.vmem [resolvable:$true] %s1236
          %1242 = dma.vmem_to_hbm [thread:$0]  %s1237, 2048, %s1235, %s1208, 64, 64, 4
        $region48: #{tpu_custom_call.1} parent=31 // pred_fallthru
          _
        // Predicated region
        $region49: #{tpu_custom_call.1} parent=31 // pred_check
          %p1243 = pneg %p143
        $region50: #{tpu_custom_call.1} parent=31 // pred_check_branch
          %1245 = sbr.rel (%p1243) target = $region52
        $region51: #{tpu_custom_call.1} parent=31 // pred_region
          %s1247 = ssub.s32 32, 32
          %1248 = vsyncadd %s1213, %s1247
          %s1249 = smul.addr %s31, 32
          %s1250 = scalar_lea.hbm %s4, %s1249
          %s1252 = sshll.u32 %s1216, 4
          %s1253 = int_to_ptr.vmem [resolvable:$true] %s1252
          %1255 = dma.vmem_to_hbm [thread:$0]  %s1253, 32, %s1250, %s1213
        $region52: #{tpu_custom_call.1} parent=31 // pred_fallthru
          _
        // Predicated region
        $region53: #{tpu_custom_call.1} parent=31 // pred_check
          %p1256 = pneg %p169
        $region54: #{tpu_custom_call.1} parent=31 // pred_check_branch
          %1258 = sbr.rel (%p1256) target = $region56
        $region55: #{tpu_custom_call.1} parent=31 // pred_region
          %s1260 = ssub.s32 512, 512
          %1261 = vsyncadd %s1218, %s1260
          %s1262 = smul.addr %s31, 8
          %s1263 = smul.addr %s1262, 64
          %s1264 = scalar_lea.hbm %s5, %s1263
          %s1265 = sshll.u32 %s1221, 4
          %s1266 = int_to_ptr.vmem [resolvable:$true] %s1265
          %1271 = dma.vmem_to_hbm [thread:$0]  %s1266, 512, %s1264, %s1218, 64, 64, 4
        $region56: #{tpu_custom_call.1} parent=31 // pred_fallthru
          _
        // Predicated region
        $region57: #{tpu_custom_call.1} parent=31 // pred_check
          %p1272 = pneg %p195
        $region58: #{tpu_custom_call.1} parent=31 // pred_check_branch
          %1274 = sbr.rel (%p1272) target = $region60
        $region59: #{tpu_custom_call.1} parent=31 // pred_region
          %s1276 = ssub.s32 32, 32
          %1277 = vsyncadd %s1223, %s1276
          %s1278 = smul.addr %s31, 32
          %s1279 = scalar_lea.hbm %s6, %s1278
          %s1281 = sshll.u32 %s1226, 4
          %s1282 = int_to_ptr.vmem [resolvable:$true] %s1281
          %1284 = dma.vmem_to_hbm [thread:$0]  %s1282, 32, %s1279, %s1223
        $region60: #{tpu_custom_call.1} parent=31 // pred_fallthru
          _
      $region32: #{tpu_custom_call.1} parent=5 // pred_fallthru
        _
      %p1285 = scmp.le.s32.totalorder 2, %s26
      // Predicated region
      $region61: #{tpu_custom_call.1} parent=5 // pred_check
        %p1286 = pneg %p1285
      $region62: #{tpu_custom_call.1} parent=5 // pred_check_branch
        %1288 = sbr.rel (%p1286) target = $region64
      $region63: #{tpu_custom_call.1} parent=5 // pred_region
        %s1289 = ssub.s32 %s26, 2
        // Predicated region
        $region65: #{tpu_custom_call.1} parent=63 // pred_check
          %p1290 = pneg %p123
        $region66: #{tpu_custom_call.1} parent=63 // pred_check_branch
          %1292 = sbr.rel (%p1290) target = $region68
        $region67: #{tpu_custom_call.1} parent=63 // pred_region
          %s1293 = sand.u32 %s108, 1
          %s1294 = scalar_lea.sflag [#allocation5], %s1293
          %s1295 = sand.u32 %s108, 1
          %s1296 = smul.addr %s1295, 128
          %s1297 = scalar_lea.vmem [#allocation9], %s1296
          %1298 = dma.done %s1294, 2048
        $region68: #{tpu_custom_call.1} parent=63 // pred_fallthru
          _
        // Predicated region
        $region69: #{tpu_custom_call.1} parent=63 // pred_check
          %p1299 = pneg %p149
        $region70: #{tpu_custom_call.1} parent=63 // pred_check_branch
          %1301 = sbr.rel (%p1299) target = $region72
        $region71: #{tpu_custom_call.1} parent=63 // pred_region
          %s1302 = sand.u32 %s32, 1
          %s1303 = scalar_lea.sflag [#allocation11], %s1302
          %s1304 = sand.u32 %s134, 1
          %s1305 = smul.addr %s1304, 2
          %s1306 = scalar_lea.vmem [#allocation10], %s1305
          %1307 = dma.done %s1303, 32
        $region72: #{tpu_custom_call.1} parent=63 // pred_fallthru
          _
        // Predicated region
        $region73: #{tpu_custom_call.1} parent=63 // pred_check
          %p1308 = pneg %p175
        $region74: #{tpu_custom_call.1} parent=63 // pred_check_branch
          %1310 = sbr.rel (%p1308) target = $region76
        $region75: #{tpu_custom_call.1} parent=63 // pred_region
          %s1311 = sand.u32 %s32, 1
          %s1312 = scalar_lea.sflag [#allocation11], %s1311
          %s1313 = sand.u32 %s160, 1
          %s1314 = smul.addr %s1313, 32
          %s1315 = scalar_lea.vmem [#allocation12], %s1314
          %1316 = dma.done %s1312, 512
        $region76: #{tpu_custom_call.1} parent=63 // pred_fallthru
          _
        // Predicated region
        $region77: #{tpu_custom_call.1} parent=63 // pred_check
          %p1317 = pneg %p201
        $region78: #{tpu_custom_call.1} parent=63 // pred_check_branch
          %1319 = sbr.rel (%p1317) target = $region80
        $region79: #{tpu_custom_call.1} parent=63 // pred_region
          %s1320 = sand.u32 %s186, 1
          %s1321 = scalar_lea.sflag [#allocation14], %s1320
          %s1322 = sand.u32 %s186, 1
          %s1323 = smul.addr %s1322, 2
          %s1324 = scalar_lea.vmem [#allocation13], %s1323
          %1325 = dma.done %s1321, 32
        $region80: #{tpu_custom_call.1} parent=63 // pred_fallthru
          _
      $region64: #{tpu_custom_call.1} parent=5 // pred_fallthru
        _
    $region6: #{tpu_custom_call.1} parent=1 // loop_footer
      %s30 = sadd.s32 1, %s26
    $region7: #{tpu_custom_call.1} parent=1 // loop_footer_branch
      %25 = sbr.rel target = $region3
    $region8: #{tpu_custom_call.1} parent=1 // loop_exit
      _
    %1326 = vsyncpa [#allocation4], 1
    %s1327 = scalar_lea.sflag [#allocation4], 1
    %1328 = vsyncpa %s1327, 1
    %1329 = vsyncpa [#allocation7], 1
    %1330 = vsyncpa [#allocation5], 1
    %s1331 = scalar_lea.sflag [#allocation5], 1
    %1332 = vsyncpa %s1331, 1
    %1333 = vsyncpa [#allocation11], 1
    %s1334 = scalar_lea.sflag [#allocation11], 1
    %1335 = vsyncpa %s1334, 1
    %1336 = vsyncpa [#allocation14], 1
    %s1337 = scalar_lea.sflag [#allocation14], 1
    %1338 = vsyncpa %s1337, 1

</llo_original>
